<compile_context>
chip_gen: v7x
topology: tpu7x:2x2x1
jax: 0.10.0
libtpu: 0.0.40
codegen_flags: <defaults>
</compile_context>

<pallas_src>
import functools

import jax
import jax.numpy as jnp
import numpy as np
from jax import lax
from jax.experimental import pallas as pl
from jax.experimental.pallas import tpu as pltpu


# ------------------------------- helpers ----------------------------------- #

def _choose_tile(n, preferred):
    """Largest candidate that evenly divides n (falls back to n itself)."""
    for cand in preferred:
        if cand <= n and n % cand == 0:
            return cand
    return n


# ----------------------------- Pallas kernels ------------------------------ #

def _encode_kernel(his_ref, user_ref, mask_ref, w1_ref, w2_ref, b_ref,
                   w3_ref, w4_ref, out_ref):
    his = his_ref[...]            # (tb, L, D) item embeddings of history
    user = user_ref[...]          # (tb, D)    user embeddings
    mask = mask_ref[...]          # (tb, L)    1.0 = real token, 0.0 = pad
    tb, L, D = his.shape

    # --- features gating: sigmoid(W1 x + W2 u + b) --------------------------
    g1 = jnp.dot(his.reshape(tb * L, D), w1_ref[...],
                 preferred_element_type=jnp.float32).reshape(tb, L, D)
    g2 = jnp.dot(user, w2_ref[...], preferred_element_type=jnp.float32)
    gate_f = jax.nn.sigmoid(g1 + g2[:, None, :] + b_ref[...][None, :, :])
    fg = his * gate_f                                                     # (tb, L, D)

    # --- instance gating: sigmoid(w3.x + W4 u) ------------------------------
    s3 = jnp.sum(fg * w3_ref[...][None, :, :], axis=-1)                   # (tb, L)
    s4 = jnp.dot(user, w4_ref[...], preferred_element_type=jnp.float32)   # (tb, L)
    gate_i = jax.nn.sigmoid(s3 + s4)
    ig = fg * gate_i[:, :, None]                                          # (tb, L, D)

    # --- masked average pooling + masked history sum ------------------------
    m3 = mask[:, :, None]
    denom = jnp.maximum(jnp.sum(mask, axis=1, keepdims=True), 1.0)  # guard all-pad rows
    pooled = jnp.sum(ig * m3, axis=1) / denom
    his_sum = jnp.sum(his * m3, axis=1)

    # TODO(synk): nn.Dropout treated as identity (eval-mode semantics).
    out_ref[...] = user + pooled + his_sum


def _loss_kernel(final_ref, label_ref, item_ref, out_ref, m_ref, l_ref,
                 *, n_rows):
    """Online log-sum-exp over (tn, D) item-table tiles; grid = (B tiles, N tiles)."""
    k = pl.program_id(1)
    tn = item_ref.shape[0]

    @pl.when(k == 0)
    def _init():
        m_ref[...] = jnp.full(m_ref.shape, -jnp.inf, jnp.float32)
        l_ref[...] = jnp.zeros(l_ref.shape, jnp.float32)

    final = final_ref[...]                                      # (tb, D) f32
    # Contract on D directly -> item table stays in its natural (rows, D) layout.
    scores = lax.dot_general(
        final.astype(jnp.bfloat16), item_ref[...],
        (((1,), (1,)), ((), ())),
        preferred_element_type=jnp.float32)                     # (tb, tn)

    # Mask the padding row (global column 0) and any tail overrun to -inf.
    col = k * tn + lax.broadcasted_iota(jnp.int32, scores.shape, 1)
    valid = jnp.logical_and(col >= 1, col < n_rows)
    scores = jnp.where(valid, scores, -jnp.inf)

    m_prev = m_ref[...]
    m_new = jnp.maximum(m_prev, jnp.max(scores, axis=-1, keepdims=True))
    alpha = jnp.exp(m_prev - m_new)
    l_ref[...] = alpha * l_ref[...] + jnp.sum(jnp.exp(scores - m_new),
                                              axis=-1, keepdims=True)
    m_ref[...] = m_new

    @pl.when(k == pl.num_programs(1) - 1)
    def _finalize():
        lse = m_ref[...] + jnp.log(l_ref[...])
        # target score = <final, item_table[label]> (labels gathered in wrapper)
        tgt = jnp.sum(final * label_ref[...], axis=-1, keepdims=True)
        out_ref[...] = lse - tgt                                # per-row loss


# ------------------------------ JAX wrappers -------------------------------- #

@functools.partial(jax.jit, static_argnames=("tb", "tn"))
def hgn_forward_loss(params, his_seqs, user_seqs, next_items, *, tb=None, tn=None):
    item_table = params["item_table"]      # (n_items + 1, D), row 0 == pad == 0
    user_table = params["user_table"]      # (n_users, D)
    w1, w2, b, w3, w4 = (params["w1"], params["w2"], params["b"],
                         params["w3"], params["w4"])

    B, L = his_seqs.shape
    R, D = item_table.shape                # R = n_items + 1 rows (row 0 = pad)

    if tb is None:
        tb = _choose_tile(B, (128, 64, 32, 16, 8))
    if tn is None:
        # Item-axis tile: biggest clean divisor; 2-buffer bf16 tiles stay tiny
        # (<= 1024*D*2B*2), far below the v7x 64 MiB / v5e-v6e 128 MiB VMEM.
        tn = _choose_tile(R, (1024, 512, 256, 128, 64, 32, 16, 8))

    # glue: embedding gathers and mask construction
    his_emb = item_table[his_seqs]                      # (B, L, D)
    user_emb = user_table[user_seqs]                    # (B, D)
    mask = (his_seqs != 0).astype(jnp.float32)          # (B, L)

    final_emb = pl.pallas_call(
        _encode_kernel,
        out_shape=jax.ShapeDtypeStruct((B, D), jnp.float32),
        grid=(B // tb,),
        in_specs=[
            pl.BlockSpec((tb, L, D), lambda i: (i, 0, 0)),   # his_emb
            pl.BlockSpec((tb, D),    lambda i: (i, 0)),      # user_emb
            pl.BlockSpec((tb, L),    lambda i: (i, 0)),      # mask
            pl.BlockSpec((D, D),     lambda i: (0, 0)),      # w1 (x @ w1)
            pl.BlockSpec((D, D),     lambda i: (0, 0)),      # w2
            pl.BlockSpec((1, D),     lambda i: (0, 0)),      # b
            pl.BlockSpec((1, D),     lambda i: (0, 0)),      # w3 (row vector)
            pl.BlockSpec((D, L),     lambda i: (0, 0)),      # w4 (u @ w4)
        ],
        out_specs=pl.BlockSpec((tb, D), lambda i: (i, 0)),
        compiler_params=pltpu.CompilerParams(
            dimension_semantics=("parallel",)),
    )(his_emb, user_emb, mask, w1, w2, b, w3, w4)

    # glue: gather label-row embeddings (replaces the dense (B, N) one-hot) and
    # a bf16 view of the item table for the MXU-bound scores matmul.
    # (In training you'd keep a persistent bf16 copy of the table.)
    label_emb = item_table[next_items]                  # (B, D) f32
    item_bf16 = item_table.astype(jnp.bfloat16)         # (R, D) bf16

    loss_rows = pl.pallas_call(
        functools.partial(_loss_kernel, n_rows=R),
        out_shape=jax.ShapeDtypeStruct((B, 1), jnp.float32),
        grid=(B // tb, pl.cdiv(R, tn)),                  # B parallel, item-axis reduction
        in_specs=[
            pl.BlockSpec((tb, D), lambda i, k: (i, 0)),  # final_emb (resident over k)
            pl.BlockSpec((tb, D), lambda i, k: (i, 0)),  # label_emb (resident over k)
            pl.BlockSpec((tn, D), lambda i, k: (k, 0)),  # streamed item tiles
        ],
        out_specs=pl.BlockSpec((tb, 1), lambda i, k: (i, 0)),
        scratch_shapes=[pltpu.VMEM((tb, 1), jnp.float32),   # running max m
                        pltpu.VMEM((tb, 1), jnp.float32)],  # running sum l
        compiler_params=pltpu.CompilerParams(
            dimension_semantics=("parallel", "arbitrary"),
            vmem_limit_bytes=48 * 1024 * 1024),          # safe on v7x's 64 MiB VMEM
    )(final_emb, label_emb, item_bf16)

    return jnp.mean(loss_rows)


# --------------------------- pure-JAX reference ----------------------------- #

def hgn_reference_loss(params, his_seqs, user_seqs, next_items):
    item_table = params["item_table"]
    user_table = params["user_table"]
    w1, w2, b, w3, w4 = (params["w1"], params["w2"], params["b"],
                         params["w3"], params["w4"])

    his_emb = item_table[his_seqs]
    user_emb = user_table[user_seqs]
    mask = (his_seqs != 0).astype(jnp.float32)

    gate_f = jax.nn.sigmoid(his_emb @ w1 + (user_emb @ w2)[:, None, :] + b)
    fg = his_emb * gate_f
    gate_i = jax.nn.sigmoid(jnp.sum(fg * w3[None, :, :], axis=-1)
                            + user_emb @ w4)
    ig = fg * gate_i[:, :, None]

    m3 = mask[:, :, None]
    denom = jnp.maximum(jnp.sum(mask, axis=1, keepdims=True), 1.0)
    pooled = jnp.sum(ig * m3, axis=1) / denom
    his_sum = jnp.sum(his_emb * m3, axis=1)
    final = user_emb + pooled + his_sum

    scores = final @ item_table[1:].T
    labels = next_items - 1
    lse = jax.scipy.special.logsumexp(scores, axis=-1)
    tgt = jnp.take_along_axis(scores, labels[:, None], axis=-1)[:, 0]
    return jnp.mean(lse - tgt)


# ---------------------------------- main ------------------------------------ #

if __name__ == "__main__":
    # small, module-consistent shapes (D lane-dense, item rows a multiple of 8)
    B, L, D = 8, 8, 128          # batch, max_len, d_model
    n_items, n_users = 255, 16   # item table has 256 rows (row 0 = padding)

    key = jax.random.PRNGKey(0)
    k_item, k_user, k1, k2, k3, k4, k_his, k_len, k_u, k_next = \
        jax.random.split(key, 10)

    item_table = 0.02 * jax.random.normal(k_item, (n_items + 1, D), jnp.float32)
    item_table = item_table.at[0].set(0.0)            # padding_idx = 0
    user_table = 0.02 * jax.random.normal(k_user, (n_users, D), jnp.float32)

    params = {
        "item_table": item_table,
        "user_table": user_table,
        "w1": 0.1 * jax.random.normal(k1, (D, D), jnp.float32),
        "w2": 0.1 * jax.random.normal(k2, (D, D), jnp.float32),
        "b": jnp.zeros((1, D), jnp.float32),
        "w3": 0.1 * jax.random.normal(k3, (1, D), jnp.float32),
        "w4": 0.1 * jax.random.normal(k4, (D, L), jnp.float32),
    }

    # history sequences with trailing padding (item ids in [1, n_items])
    his_seqs = jax.random.randint(k_his, (B, L), 1, n_items + 1, jnp.int32)
    lengths = jax.random.randint(k_len, (B,), 1, L + 1, jnp.int32)
    pos = jnp.arange(L)[None, :]
    his_seqs = jnp.where(pos < lengths[:, None], his_seqs, 0)

    user_seqs = jax.random.randint(k_u, (B,), 0, n_users, jnp.int32)
    next_items = jax.random.randint(k_next, (B,), 1, n_items + 1, jnp.int32)

    # force tn=128 so the test exercises the multi-tile online-logsumexp path
    loss = hgn_forward_loss(params, his_seqs, user_seqs, next_items, tn=128)
    loss = jax.block_until_ready(loss)

    ref = jax.block_until_ready(
        hgn_reference_loss(params, his_seqs, user_seqs, next_items))
    np.testing.assert_allclose(np.array(loss), np.array(ref),
                               rtol=1e-3, atol=1e-3)

    print("KERNEL_OK")
</pallas_src>

<mosaic_0001>
module attributes {stable_mosaic.version = 11 : i64} {
  func.func @_encode_kernel(%arg0: i32, %arg1: memref<8x8x128xf32, #tpu.memory_space<vmem>>, %arg2: memref<8x128xf32, #tpu.memory_space<vmem>>, %arg3: memref<8x8xf32, #tpu.memory_space<vmem>>, %arg4: memref<128x128xf32, #tpu.memory_space<vmem>>, %arg5: memref<128x128xf32, #tpu.memory_space<vmem>>, %arg6: memref<1x128xf32, #tpu.memory_space<vmem>>, %arg7: memref<1x128xf32, #tpu.memory_space<vmem>>, %arg8: memref<128x8xf32, #tpu.memory_space<vmem>>, %arg9: memref<8x128xf32, #tpu.memory_space<vmem>>) attributes {dimension_semantics = [#tpu.dimension_semantics<parallel>], iteration_bounds = array<i64: 1>, scalar_prefetch = 0 : i64, scratch_operands = 0 : i64, tpu.core_type = #tpu.core_type<tc>, window_params = [{transform_indices = @transform_0, window_bounds = array<i64: 8, 8, 128>}, {transform_indices = @transform_1, window_bounds = array<i64: 8, 128>}, {transform_indices = @transform_2, window_bounds = array<i64: 8, 8>}, {pipeline_mode = #tpu.pipeline_mode<synchronous>, transform_indices = @transform_3, window_bounds = array<i64: 128, 128>}, {pipeline_mode = #tpu.pipeline_mode<synchronous>, transform_indices = @transform_4, window_bounds = array<i64: 128, 128>}, {pipeline_mode = #tpu.pipeline_mode<synchronous>, transform_indices = @transform_5, window_bounds = array<i64: 1, 128>}, {pipeline_mode = #tpu.pipeline_mode<synchronous>, transform_indices = @transform_6, window_bounds = array<i64: 1, 128>}, {pipeline_mode = #tpu.pipeline_mode<synchronous>, transform_indices = @transform_7, window_bounds = array<i64: 128, 8>}, {transform_indices = @transform_8, window_bounds = array<i64: 8, 128>}]} {
    %c0 = arith.constant 0 : index
    %c0_0 = arith.constant 0 : index
    %c0_1 = arith.constant 0 : index
    %0 = vector.load %arg1[%c0, %c0_0, %c0_1] : memref<8x8x128xf32, #tpu.memory_space<vmem>>, vector<8x8x128xf32>
    %c0_2 = arith.constant 0 : index
    %c0_3 = arith.constant 0 : index
    %1 = vector.load %arg2[%c0_2, %c0_3] : memref<8x128xf32, #tpu.memory_space<vmem>>, vector<8x128xf32>
    %c0_4 = arith.constant 0 : index
    %c0_5 = arith.constant 0 : index
    %2 = vector.load %arg3[%c0_4, %c0_5] : memref<8x8xf32, #tpu.memory_space<vmem>>, vector<8x8xf32>
    %3 = vector.shape_cast %0 : vector<8x8x128xf32> to vector<64x128xf32>
    %c0_6 = arith.constant 0 : index
    %c0_7 = arith.constant 0 : index
    %4 = vector.load %arg4[%c0_6, %c0_7] : memref<128x128xf32, #tpu.memory_space<vmem>>, vector<128x128xf32>
    %cst = arith.constant dense<0.000000e+00> : vector<64x128xf32>
    %5 = tpu.matmul %3, %4, %cst {dimension_numbers = #tpu.dot_dimension_numbers<[1], [0], [0], [1], [0, 0, 1, 1], [], []>} : vector<64x128xf32>, vector<128x128xf32>, vector<64x128xf32> -> vector<64x128xf32>
    %6 = vector.shape_cast %5 : vector<64x128xf32> to vector<8x8x128xf32>
    %c0_8 = arith.constant 0 : index
    %c0_9 = arith.constant 0 : index
    %7 = vector.load %arg5[%c0_8, %c0_9] : memref<128x128xf32, #tpu.memory_space<vmem>>, vector<128x128xf32>
    %cst_10 = arith.constant dense<0.000000e+00> : vector<8x128xf32>
    %8 = tpu.matmul %1, %7, %cst_10 {dimension_numbers = #tpu.dot_dimension_numbers<[1], [0], [0], [1], [0, 0, 1, 1], [], []>} : vector<8x128xf32>, vector<128x128xf32>, vector<8x128xf32> -> vector<8x128xf32>
    %9 = vector.shape_cast %8 : vector<8x128xf32> to vector<8x1x128xf32>
    %10 = vector.broadcast %9 : vector<8x1x128xf32> to vector<8x8x128xf32>
    %11 = arith.addf %6, %10 : vector<8x8x128xf32>
    %c0_11 = arith.constant 0 : index
    %c0_12 = arith.constant 0 : index
    %12 = vector.load %arg6[%c0_11, %c0_12] : memref<1x128xf32, #tpu.memory_space<vmem>>, vector<1x128xf32>
    %13 = vector.shape_cast %12 : vector<1x128xf32> to vector<1x1x128xf32>
    %14 = vector.broadcast %13 : vector<1x1x128xf32> to vector<8x8x128xf32>
    %15 = arith.addf %11, %14 : vector<8x8x128xf32>
    %16 = arith.negf %15 : vector<8x8x128xf32>
    %17 = math.exp %16 : vector<8x8x128xf32>
    %cst_13 = arith.constant 1.000000e+00 : f32
    %18 = vector.broadcast %cst_13 : f32 to vector<8x8x128xf32>
    %19 = arith.addf %18, %17 : vector<8x8x128xf32>
    %20 = arith.divf %18, %19 : vector<8x8x128xf32>
    %21 = arith.mulf %0, %20 : vector<8x8x128xf32>
    %c0_14 = arith.constant 0 : index
    %c0_15 = arith.constant 0 : index
    %22 = vector.load %arg7[%c0_14, %c0_15] : memref<1x128xf32, #tpu.memory_space<vmem>>, vector<1x128xf32>
    %23 = vector.shape_cast %22 : vector<1x128xf32> to vector<1x1x128xf32>
    %24 = vector.broadcast %23 : vector<1x1x128xf32> to vector<8x8x128xf32>
    %25 = arith.mulf %21, %24 : vector<8x8x128xf32>
    %cst_16 = arith.constant dense<0.000000e+00> : vector<8x8xf32>
    %26 = vector.multi_reduction <add>, %25, %cst_16 [2] : vector<8x8x128xf32> to vector<8x8xf32>
    %c0_17 = arith.constant 0 : index
    %c0_18 = arith.constant 0 : index
    %27 = vector.load %arg8[%c0_17, %c0_18] : memref<128x8xf32, #tpu.memory_space<vmem>>, vector<128x8xf32>
    %cst_19 = arith.constant dense<0.000000e+00> : vector<8x8xf32>
    %28 = tpu.matmul %1, %27, %cst_19 {dimension_numbers = #tpu.dot_dimension_numbers<[1], [0], [0], [1], [0, 0, 1, 1], [], []>} : vector<8x128xf32>, vector<128x8xf32>, vector<8x8xf32> -> vector<8x8xf32>
    %29 = arith.addf %26, %28 : vector<8x8xf32>
    %30 = arith.negf %29 : vector<8x8xf32>
    %31 = math.exp %30 : vector<8x8xf32>
    %cst_20 = arith.constant 1.000000e+00 : f32
    %32 = vector.broadcast %cst_20 : f32 to vector<8x8xf32>
    %33 = arith.addf %32, %31 : vector<8x8xf32>
    %34 = arith.divf %32, %33 : vector<8x8xf32>
    %35 = vector.shape_cast %34 : vector<8x8xf32> to vector<8x8x1xf32>
    %36 = vector.broadcast %35 : vector<8x8x1xf32> to vector<8x8x128xf32>
    %37 = arith.mulf %21, %36 : vector<8x8x128xf32>
    %38 = vector.shape_cast %2 : vector<8x8xf32> to vector<8x8x1xf32>
    %cst_21 = arith.constant dense<0.000000e+00> : vector<8xf32>
    %39 = vector.multi_reduction <add>, %2, %cst_21 [1] : vector<8x8xf32> to vector<8xf32>
    %40 = vector.shape_cast %39 : vector<8xf32> to vector<8x1xf32>
    %cst_22 = arith.constant 1.000000e+00 : f32
    %41 = vector.broadcast %cst_22 : f32 to vector<8x1xf32>
    %42 = arith.maximumf %40, %41 : vector<8x1xf32>
    %43 = vector.broadcast %38 : vector<8x8x1xf32> to vector<8x8x128xf32>
    %44 = arith.mulf %37, %43 : vector<8x8x128xf32>
    %cst_23 = arith.constant dense<0.000000e+00> : vector<8x128xf32>
    %45 = vector.multi_reduction <add>, %44, %cst_23 [1] : vector<8x8x128xf32> to vector<8x128xf32>
    %46 = vector.broadcast %42 : vector<8x1xf32> to vector<8x128xf32>
    %47 = arith.divf %45, %46 : vector<8x128xf32>
    %48 = vector.broadcast %38 : vector<8x8x1xf32> to vector<8x8x128xf32>
    %49 = arith.mulf %0, %48 : vector<8x8x128xf32>
    %cst_24 = arith.constant dense<0.000000e+00> : vector<8x128xf32>
    %50 = vector.multi_reduction <add>, %49, %cst_24 [1] : vector<8x8x128xf32> to vector<8x128xf32>
    %51 = arith.addf %1, %47 : vector<8x128xf32>
    %52 = arith.addf %51, %50 : vector<8x128xf32>
    %c0_25 = arith.constant 0 : index
    %c0_26 = arith.constant 0 : index
    %53 = vector.load %arg9[%c0_25, %c0_26] : memref<8x128xf32, #tpu.memory_space<vmem>>, vector<8x128xf32>
    tpu.vector_store %arg9[%c0_25, %c0_26], %52 {strides = array<i32>} : memref<8x128xf32, #tpu.memory_space<vmem>>, vector<8x128xf32>,
    return
  }
  func.func @transform_0(%arg0: i32) -> (i32, i32, i32) {
    %c0_i32 = arith.constant 0 : i32
    %c0_i32_0 = arith.constant 0 : i32
    %c0_i32_1 = arith.constant 0 : i32
    return %arg0, %c0_i32, %c0_i32_0 : i32, i32, i32
  }
  func.func @transform_1(%arg0: i32) -> (i32, i32) {
    %c0_i32 = arith.constant 0 : i32
    %c0_i32_0 = arith.constant 0 : i32
    return %arg0, %c0_i32 : i32, i32
  }
  func.func @transform_2(%arg0: i32) -> (i32, i32) {
    %c0_i32 = arith.constant 0 : i32
    %c0_i32_0 = arith.constant 0 : i32
    return %arg0, %c0_i32 : i32, i32
  }
  func.func @transform_3(%arg0: i32) -> (i32, i32) {
    %c0_i32 = arith.constant 0 : i32
    %c0_i32_0 = arith.constant 0 : i32
    %c0_i32_1 = arith.constant 0 : i32
    return %c0_i32, %c0_i32_0 : i32, i32
  }
  func.func @transform_4(%arg0: i32) -> (i32, i32) {
    %c0_i32 = arith.constant 0 : i32
    %c0_i32_0 = arith.constant 0 : i32
    %c0_i32_1 = arith.constant 0 : i32
    return %c0_i32, %c0_i32_0 : i32, i32
  }
  func.func @transform_5(%arg0: i32) -> (i32, i32) {
    %c0_i32 = arith.constant 0 : i32
    %c0_i32_0 = arith.constant 0 : i32
    %c0_i32_1 = arith.constant 0 : i32
    return %c0_i32, %c0_i32_0 : i32, i32
  }
  func.func @transform_6(%arg0: i32) -> (i32, i32) {
    %c0_i32 = arith.constant 0 : i32
    %c0_i32_0 = arith.constant 0 : i32
    %c0_i32_1 = arith.constant 0 : i32
    return %c0_i32, %c0_i32_0 : i32, i32
  }
  func.func @transform_7(%arg0: i32) -> (i32, i32) {
    %c0_i32 = arith.constant 0 : i32
    %c0_i32_0 = arith.constant 0 : i32
    %c0_i32_1 = arith.constant 0 : i32
    return %c0_i32, %c0_i32_0 : i32, i32
  }
  func.func @transform_8(%arg0: i32) -> (i32, i32) {
    %c0_i32 = arith.constant 0 : i32
    %c0_i32_0 = arith.constant 0 : i32
    return %arg0, %c0_i32 : i32, i32
  }
}

module attributes {stable_mosaic.version = 11 : i64} {
  func.func @_loss_kernel(%arg0: i32, %arg1: i32, %arg2: memref<8x128xf32, #tpu.memory_space<vmem>>, %arg3: memref<8x128xf32, #tpu.memory_space<vmem>>, %arg4: memref<128x128xbf16, #tpu.memory_space<vmem>>, %arg5: memref<8x1xf32, #tpu.memory_space<vmem>>, %arg6: memref<8x1xf32, #tpu.memory_space<vmem>>, %arg7: memref<8x1xf32, #tpu.memory_space<vmem>>) attributes {dimension_semantics = [#tpu.dimension_semantics<parallel>, #tpu.dimension_semantics<arbitrary>], iteration_bounds = array<i64: 1, 2>, scalar_prefetch = 0 : i64, scratch_operands = 2 : i64, tpu.core_type = #tpu.core_type<tc>, window_params = [{transform_indices = @transform_0, window_bounds = array<i64: 8, 128>}, {transform_indices = @transform_1, window_bounds = array<i64: 8, 128>}, {transform_indices = @transform_2, window_bounds = array<i64: 128, 128>}, {transform_indices = @transform_3, window_bounds = array<i64: 8, 1>}]} {
    %c0_i32 = arith.constant 0 : i32
    %0 = arith.cmpi eq, %arg1, %c0_i32 : i32
    %1 = arith.extui %0 : i1 to i32
    %c0_i32_0 = arith.constant 0 : i32
    %2 = arith.cmpi ne, %1, %c0_i32_0 : i32
    scf.if %2 {
      %cst_17 = arith.constant 0xFF800000 : f32
      %37 = vector.broadcast %cst_17 : f32 to vector<8x1xf32>
      %c0_18 = arith.constant 0 : index
      %c0_19 = arith.constant 0 : index
      %38 = vector.load %arg6[%c0_18, %c0_19] : memref<8x1xf32, #tpu.memory_space<vmem>>, vector<8x1xf32>
      tpu.vector_store %arg6[%c0_18, %c0_19], %37 {strides = array<i32>} : memref<8x1xf32, #tpu.memory_space<vmem>>, vector<8x1xf32>,
      %cst_20 = arith.constant 0.000000e+00 : f32
      %39 = vector.broadcast %cst_20 : f32 to vector<8x1xf32>
      %c0_21 = arith.constant 0 : index
      %c0_22 = arith.constant 0 : index
      %40 = vector.load %arg7[%c0_21, %c0_22] : memref<8x1xf32, #tpu.memory_space<vmem>>, vector<8x1xf32>
      tpu.vector_store %arg7[%c0_21, %c0_22], %39 {strides = array<i32>} : memref<8x1xf32, #tpu.memory_space<vmem>>, vector<8x1xf32>,
    } else {
    }
    %c0 = arith.constant 0 : index
    %c0_1 = arith.constant 0 : index
    %3 = vector.load %arg2[%c0, %c0_1] : memref<8x128xf32, #tpu.memory_space<vmem>>, vector<8x128xf32>
    %4 = arith.truncf %3 : vector<8x128xf32> to vector<8x128xbf16>
    %c0_2 = arith.constant 0 : index
    %c0_3 = arith.constant 0 : index
    %5 = vector.load %arg4[%c0_2, %c0_3] : memref<128x128xbf16, #tpu.memory_space<vmem>>, vector<128x128xbf16>
    %cst = arith.constant dense<0.000000e+00> : vector<8x128xf32>
    %6 = tpu.matmul %4, %5, %cst {dimension_numbers = #tpu.dot_dimension_numbers<[1], [1], [0], [0], [0, 0, 1, 0], [], []>} : vector<8x128xbf16>, vector<128x128xbf16>, vector<8x128xf32> -> vector<8x128xf32>
    %c128_i32 = arith.constant 128 : i32
    %7 = arith.muli %arg1, %c128_i32 : i32
    %8 = tpu.iota {dimensions = array<i32: 1>} : vector<8x128xi32>
    %9 = vector.broadcast %7 : i32 to vector<8x128xi32>
    %10 = arith.addi %9, %8 : vector<8x128xi32>
    %c1_i32 = arith.constant 1 : i32
    %11 = vector.broadcast %c1_i32 : i32 to vector<8x128xi32>
    %12 = arith.cmpi sge, %10, %11 : vector<8x128xi32>
    %c256_i32 = arith.constant 256 : i32
    %13 = vector.broadcast %c256_i32 : i32 to vector<8x128xi32>
    %14 = arith.cmpi slt, %10, %13 : vector<8x128xi32>
    %15 = arith.andi %12, %14 : vector<8x128xi1>
    %cst_4 = arith.constant 0xFF800000 : f32
    %16 = vector.broadcast %cst_4 : f32 to vector<8x128xf32>
    %17 = arith.select %15, %6, %16 : vector<8x128xi1>, vector<8x128xf32>
    %c0_5 = arith.constant 0 : index
    %c0_6 = arith.constant 0 : index
    %18 = vector.load %arg6[%c0_5, %c0_6] : memref<8x1xf32, #tpu.memory_space<vmem>>, vector<8x1xf32>
    %cst_7 = arith.constant dense<0xFF800000> : vector<8xf32>
    %19 = vector.multi_reduction <maximumf>, %17, %cst_7 [1] : vector<8x128xf32> to vector<8xf32>
    %20 = vector.shape_cast %19 : vector<8xf32> to vector<8x1xf32>
    %21 = arith.maximumf %18, %20 : vector<8x1xf32>
    %22 = arith.subf %18, %21 : vector<8x1xf32>
    %23 = math.exp %22 : vector<8x1xf32>
    %c0_8 = arith.constant 0 : index
    %c0_9 = arith.constant 0 : index
    %24 = vector.load %arg7[%c0_8, %c0_9] : memref<8x1xf32, #tpu.memory_space<vmem>>, vector<8x1xf32>
    %25 = arith.mulf %23, %24 : vector<8x1xf32>
    %26 = vector.broadcast %21 : vector<8x1xf32> to vector<8x128xf32>
    %27 = arith.subf %17, %26 : vector<8x128xf32>
    %28 = math.exp %27 : vector<8x128xf32>
    %cst_10 = arith.constant dense<0.000000e+00> : vector<8xf32>
    %29 = vector.multi_reduction <add>, %28, %cst_10 [1] : vector<8x128xf32> to vector<8xf32>
    %30 = vector.shape_cast %29 : vector<8xf32> to vector<8x1xf32>
    %31 = arith.addf %25, %30 : vector<8x1xf32>
    %c0_11 = arith.constant 0 : index
    %c0_12 = arith.constant 0 : index
    %32 = vector.load %arg7[%c0_11, %c0_12] : memref<8x1xf32, #tpu.memory_space<vmem>>, vector<8x1xf32>
    tpu.vector_store %arg7[%c0_11, %c0_12], %31 {strides = array<i32>} : memref<8x1xf32, #tpu.memory_space<vmem>>, vector<8x1xf32>,
    %c0_13 = arith.constant 0 : index
    %c0_14 = arith.constant 0 : index
    %33 = vector.load %arg6[%c0_13, %c0_14] : memref<8x1xf32, #tpu.memory_space<vmem>>, vector<8x1xf32>
    tpu.vector_store %arg6[%c0_13, %c0_14], %21 {strides = array<i32>} : memref<8x1xf32, #tpu.memory_space<vmem>>, vector<8x1xf32>,
    %c1_i32_15 = arith.constant 1 : i32
    %34 = arith.cmpi eq, %arg1, %c1_i32_15 : i32
    %35 = arith.extui %34 : i1 to i32
    %c0_i32_16 = arith.constant 0 : i32
    %36 = arith.cmpi ne, %35, %c0_i32_16 : i32
    scf.if %36 {
      %c0_17 = arith.constant 0 : index
      %c0_18 = arith.constant 0 : index
      %37 = vector.load %arg6[%c0_17, %c0_18] : memref<8x1xf32, #tpu.memory_space<vmem>>, vector<8x1xf32>
      %c0_19 = arith.constant 0 : index
      %c0_20 = arith.constant 0 : index
      %38 = vector.load %arg7[%c0_19, %c0_20] : memref<8x1xf32, #tpu.memory_space<vmem>>, vector<8x1xf32>
      %39 = math.log %38 : vector<8x1xf32>
      %40 = arith.addf %37, %39 : vector<8x1xf32>
      %c0_21 = arith.constant 0 : index
      %c0_22 = arith.constant 0 : index
      %41 = vector.load %arg3[%c0_21, %c0_22] : memref<8x128xf32, #tpu.memory_space<vmem>>, vector<8x128xf32>
      %42 = arith.mulf %3, %41 : vector<8x128xf32>
      %cst_23 = arith.constant dense<0.000000e+00> : vector<8xf32>
      %43 = vector.multi_reduction <add>, %42, %cst_23 [1] : vector<8x128xf32> to vector<8xf32>
      %44 = vector.shape_cast %43 : vector<8xf32> to vector<8x1xf32>
      %45 = arith.subf %40, %44 : vector<8x1xf32>
      %c0_24 = arith.constant 0 : index
      %c0_25 = arith.constant 0 : index
      %46 = vector.load %arg5[%c0_24, %c0_25] : memref<8x1xf32, #tpu.memory_space<vmem>>, vector<8x1xf32>
      tpu.vector_store %arg5[%c0_24, %c0_25], %45 {strides = array<i32>} : memref<8x1xf32, #tpu.memory_space<vmem>>, vector<8x1xf32>,
    } else {
    }
    return
  }
  func.func @transform_0(%arg0: i32, %arg1: i32) -> (i32, i32) {
    %c0_i32 = arith.constant 0 : i32
    %c0_i32_0 = arith.constant 0 : i32
    return %arg0, %c0_i32 : i32, i32
  }
  func.func @transform_1(%arg0: i32, %arg1: i32) -> (i32, i32) {
    %c0_i32 = arith.constant 0 : i32
    %c0_i32_0 = arith.constant 0 : i32
    return %arg0, %c0_i32 : i32, i32
  }
  func.func @transform_2(%arg0: i32, %arg1: i32) -> (i32, i32) {
    %c0_i32 = arith.constant 0 : i32
    %c0_i32_0 = arith.constant 0 : i32
    return %arg1, %c0_i32 : i32, i32
  }
  func.func @transform_3(%arg0: i32, %arg1: i32) -> (i32, i32) {
    %c0_i32 = arith.constant 0 : i32
    %c0_i32_0 = arith.constant 0 : i32
    return %arg0, %c0_i32 : i32, i32
  }
}

</mosaic_0001>

<llo_original>
// kernel: hgn_forward_loss.3
$region0: #{hgn_forward_loss.3}
  #allocation0 [shape = 'u32[]', space=smem, size = 0x4, offset = 0x4, fixed_abs, tag = 'smem constant byte address 0x4 - core index']
  #allocation1 [shape = 'u32[144,128]{1,0:T(1,128)}', space=vmem, size = 0x12000, scoped, tag = 'internal scratch']
  #allocation2 [shape = 'f32[8,1]{1,0:T(8,128)}', space=vmem, size = 0x1000, scoped, tag = 'scratch operand']
  #allocation3 [shape = 'f32[8,1]{1,0:T(8,128)}', space=vmem, size = 0x1000, scoped, tag = 'scratch operand']
  %s0 = inlined_call_operand.vmem [shape: f32[8,128], index: 0, kind: input, shape index: {}]
  %s1 = inlined_call_operand.vmem [shape: f32[8,128], index: 1, kind: input, shape index: {}]
  %s2 = inlined_call_operand.vmem [shape: bf16[256,128], index: 2, kind: input, shape index: {}]
  %s3 = inlined_call_operand.vmem [shape: f32[8,1], index: 3, kind: output, shape index: {}]
  %s4 = sld [smem:[#allocation0]]
  $region53: #{hgn_forward_loss.3} parent=0
    _
  %s6 = ssub.s32 1, %s4
  %s7 = scalar_select 0, %s6, %s4
  loop: start=0, step=1, limit=4
  $region2: #{hgn_forward_loss.3} parent=0 // loop_pre_header
    _
  $region3: #{hgn_forward_loss.3} parent=0 // loop_header
    %s9 = sphi 0, %s13
    %p10 = scmp.ge.s32.totalorder %s9, 4
    %s16 = sphi 0, %s28
    %s17 = sphi 0, %s24
    %s18 = sphi 0, %s16
    %s19 = sphi 0, %s17
    %s20 = sphi 0, %s18
    %s21 = sphi 0, %s19
    %s31 = sphi 0, %s33
    %s34 = sphi 0, %s31
    %s35 = sphi 0, %s34
    %s51 = sphi 0, %s35
    %s57 = sphi 0, %s59
    %s60 = sphi 0, %s57
    %s61 = sphi 0, %s60
    %s77 = sphi 0, %s61
    %s83 = sphi 0, %s85
    %s86 = sphi 0, %s83
    %s87 = sphi 0, %s86
    %s103 = sphi 0, %s87
    %s109 = sphi 0, %s111
    %s112 = sphi 0, %s109
    %s113 = sphi 0, %s112
    %s129 = sphi 0, %s113
  $region4: #{hgn_forward_loss.3} parent=0 // loop_header_branch
    %12 = sbr.rel (%p10) target = $region8
  $region5: #{hgn_forward_loss.3} parent=0 // loop_body
    %s14 = ssub.s32 %s9, 1
    %s15 = ssub.s32 %s9, 2
    %s22 = sadd.s32 1, %s17
    %p23 = scmp.ge.s32.totalorder %s22, 2
    %s24 = scalar_select %p23, 0, %s22
    %s25 = sadd.s32 1, %s16
    %s26 = scalar_select %p23, %s25, %s16
    %p27 = scmp.ge.s32.totalorder %s26, 1
    %s28 = scalar_select %p27, 0, %s26
    %s29 = ssub.s32 %s16, %s28
    %p30 = scmp.eq.s32.totalorder %s29, 0
    %s32 = sadd.s32 %s31, 1
    %s33 = scalar_select %p30, %s31, %s32
    %p36 = pneg %p30
    %p37 = scmp.eq.s32.totalorder %s9, 1
    %p38 = por %p36, %p37
    %p39 = scmp.ne.s32.totalorder %s31, %s34
    %p40 = scmp.eq.s32.totalorder %s9, 0
    %p41 = por %p39, %p40
    %p42 = scmp.ne.s32.totalorder %s31, %s34
    %p43 = scmp.eq.s32.totalorder %s14, 1
    %p44 = por %p42, %p43
    %p45 = scmp.ne.s32.totalorder %s34, %s35
    %p46 = scmp.eq.s32.totalorder %s14, 0
    %p47 = por %p45, %p46
    %p48 = scmp.ne.s32.totalorder %s34, %s35
    %p49 = scmp.eq.s32.totalorder %s15, 1
    %p50 = por %p48, %p49
    %p52 = scmp.ne.s32.totalorder %s35, %s51
    %p53 = scmp.eq.s32.totalorder %s15, 0
    %p54 = por %p52, %p53
    %s55 = ssub.s32 %s16, %s28
    %p56 = scmp.eq.s32.totalorder %s55, 0
    %s58 = sadd.s32 %s57, 1
    %s59 = scalar_select %p56, %s57, %s58
    %p62 = pneg %p56
    %p63 = scmp.eq.s32.totalorder %s9, 1
    %p64 = por %p62, %p63
    %p65 = scmp.ne.s32.totalorder %s57, %s60
    %p66 = scmp.eq.s32.totalorder %s9, 0
    %p67 = por %p65, %p66
    %p68 = scmp.ne.s32.totalorder %s57, %s60
    %p69 = scmp.eq.s32.totalorder %s14, 1
    %p70 = por %p68, %p69
    %p71 = scmp.ne.s32.totalorder %s60, %s61
    %p72 = scmp.eq.s32.totalorder %s14, 0
    %p73 = por %p71, %p72
    %p74 = scmp.ne.s32.totalorder %s60, %s61
    %p75 = scmp.eq.s32.totalorder %s15, 1
    %p76 = por %p74, %p75
    %p78 = scmp.ne.s32.totalorder %s61, %s77
    %p79 = scmp.eq.s32.totalorder %s15, 0
    %p80 = por %p78, %p79
    %s81 = ssub.s32 %s17, %s24
    %p82 = scmp.eq.s32.totalorder %s81, 0
    %s84 = sadd.s32 %s83, 1
    %s85 = scalar_select %p82, %s83, %s84
    %p88 = pneg %p82
    %p89 = scmp.eq.s32.totalorder %s9, 1
    %p90 = por %p88, %p89
    %p91 = scmp.ne.s32.totalorder %s83, %s86
    %p92 = scmp.eq.s32.totalorder %s9, 0
    %p93 = por %p91, %p92
    %p94 = scmp.ne.s32.totalorder %s83, %s86
    %p95 = scmp.eq.s32.totalorder %s14, 1
    %p96 = por %p94, %p95
    %p97 = scmp.ne.s32.totalorder %s86, %s87
    %p98 = scmp.eq.s32.totalorder %s14, 0
    %p99 = por %p97, %p98
    %p100 = scmp.ne.s32.totalorder %s86, %s87
    %p101 = scmp.eq.s32.totalorder %s15, 1
    %p102 = por %p100, %p101
    %p104 = scmp.ne.s32.totalorder %s87, %s103
    %p105 = scmp.eq.s32.totalorder %s15, 0
    %p106 = por %p104, %p105
    %s107 = ssub.s32 %s16, %s28
    %p108 = scmp.eq.s32.totalorder %s107, 0
    %s110 = sadd.s32 %s109, 1
    %s111 = scalar_select %p108, %s109, %s110
    %p114 = pneg %p108
    %p115 = scmp.eq.s32.totalorder %s9, 1
    %p116 = por %p114, %p115
    %p117 = scmp.ne.s32.totalorder %s109, %s112
    %p118 = scmp.eq.s32.totalorder %s9, 0
    %p119 = por %p117, %p118
    %p120 = scmp.ne.s32.totalorder %s109, %s112
    %p121 = scmp.eq.s32.totalorder %s14, 1
    %p122 = por %p120, %p121
    %p123 = scmp.ne.s32.totalorder %s112, %s113
    %p124 = scmp.eq.s32.totalorder %s14, 0
    %p125 = por %p123, %p124
    %p126 = scmp.ne.s32.totalorder %s112, %s113
    %p127 = scmp.eq.s32.totalorder %s15, 1
    %p128 = por %p126, %p127
    %p130 = scmp.ne.s32.totalorder %s113, %s129
    %p131 = scmp.eq.s32.totalorder %s15, 0
    %p132 = por %p130, %p131
    %p133 = scmp.le.s32.totalorder 1, %s9
    %p134 = scmp.lt.s32.totalorder %s9, 3
    %p135 = pnand %p133, %p134
    %p136 = pneg %p135
    // Predicated region
    $region9: #{hgn_forward_loss.3} parent=5 // pred_check
      _
    $region10: #{hgn_forward_loss.3} parent=5 // pred_check_branch
      %138 = sbr.rel (%p135) target = $region12
    $region11: #{hgn_forward_loss.3} parent=5 // pred_region
      %s139 = ssub.s32 %s9, 1
      // Predicated region
      $region13: #{hgn_forward_loss.3} parent=11 // pred_check
        %p140 = pneg %p47
      $region14: #{hgn_forward_loss.3} parent=11 // pred_check_branch
        %142 = sbr.rel (%p140) target = $region16
      $region15: #{hgn_forward_loss.3} parent=11 // pred_region
        %p143 = scmp.lt.s32.totalorder %s18, 0
        %s144 = scalar_select %p143, %s18, 0
        %s145 = smul.addr %s144, 8
        %s146 = scalar_lea.vmem %s0, %s145
      $region16: #{hgn_forward_loss.3} parent=11 // pred_fallthru
        _
      // Predicated region
      $region17: #{hgn_forward_loss.3} parent=11 // pred_check
        %p147 = pneg %p73
      $region18: #{hgn_forward_loss.3} parent=11 // pred_check_branch
        %149 = sbr.rel (%p147) target = $region20
      $region19: #{hgn_forward_loss.3} parent=11 // pred_region
        %p150 = scmp.lt.s32.totalorder %s18, 0
        %s151 = scalar_select %p150, %s18, 0
        %s152 = smul.addr %s151, 8
        %s153 = scalar_lea.vmem %s1, %s152
      $region20: #{hgn_forward_loss.3} parent=11 // pred_fallthru
        _
    $region12: #{hgn_forward_loss.3} parent=5 // pred_fallthru
      _
    %p154 = scmp.lt.s32.totalorder %s9, 2
    // Predicated region
    $region21: #{hgn_forward_loss.3} parent=5 // pred_check
      %p155 = pneg %p154
    $region22: #{hgn_forward_loss.3} parent=5 // pred_check_branch
      %157 = sbr.rel (%p155) target = $region24
    $region23: #{hgn_forward_loss.3} parent=5 // pred_region
      // Predicated region
      $region25: #{hgn_forward_loss.3} parent=23 // pred_check
        %p158 = pneg %p93
      $region26: #{hgn_forward_loss.3} parent=23 // pred_check_branch
        %160 = sbr.rel (%p158) target = $region28
      $region27: #{hgn_forward_loss.3} parent=23 // pred_region
        %s161 = smul.u32 16, %s17
        %p162 = scmp.lt.s32.totalorder %s161, 31
        %s163 = scalar_select %p162, %s161, 31
        %s164 = smul.addr %s163, 4
        %s165 = scalar_lea.vmem %s2, %s164
        %s166 = smul.u32 16, %s17
      $region28: #{hgn_forward_loss.3} parent=23 // pred_fallthru
        _
    $region24: #{hgn_forward_loss.3} parent=5 // pred_fallthru
      _
    %p167 = scmp.le.s32.totalorder 1, %s9
    %p168 = scmp.lt.s32.totalorder %s9, 3
    %p169 = pnand %p167, %p168
    %p170 = pneg %p169
    // Predicated region
    $region29: #{hgn_forward_loss.3} parent=5 // pred_check
      _
    $region30: #{hgn_forward_loss.3} parent=5 // pred_check_branch
      %172 = sbr.rel (%p169) target = $region32
    $region31: #{hgn_forward_loss.3} parent=5 // pred_region
      %s173 = ssub.s32 %s9, 1
      %p174 = scmp.lt.s32.totalorder %s18, 0
      %s175 = scalar_select %p174, %s18, 0
      %s176 = smul.addr %s175, 8
      %s177 = scalar_lea.vmem %s0, %s176
      %p178 = pneg %p47
      %p179 = pneg %p44
      %p180 = scmp.lt.s32.totalorder %s18, 0
      %s181 = scalar_select %p180, %s18, 0
      %s182 = smul.addr %s181, 8
      %s183 = scalar_lea.vmem %s1, %s182
      %p184 = pneg %p73
      %p185 = pneg %p70
      %s186 = smul.u32 16, %s19
      %p187 = scmp.lt.s32.totalorder %s186, 31
      %s188 = scalar_select %p187, %s186, 31
      %s189 = smul.addr %s188, 4
      %s190 = scalar_lea.vmem %s2, %s189
      %p191 = pneg %p99
      %p192 = pneg %p96
      %p193 = pneg %p125
      %p194 = pneg %p122
      %p195 = scmp.lt.s32.totalorder %s18, 0
      %s196 = scalar_select %p195, %s18, 0
      %s197 = smul.addr %s196, 8
      %s198 = scalar_lea.vmem %s3, %s197
      %p199 = scmp.lt.s32.totalorder %s18, 0
      %s200 = scalar_select %p199, %s18, 0
      %s201 = smul.addr %s200, 8
      %s202 = scalar_lea.vmem %s0, %s201
      %p203 = scmp.lt.s32.totalorder %s18, 0
      %s204 = scalar_select %p203, %s18, 0
      %s205 = smul.addr %s204, 8
      %s206 = scalar_lea.vmem %s1, %s205
      %s207 = smul.u32 16, %s19
      %p208 = scmp.lt.s32.totalorder %s207, 31
      %s209 = scalar_select %p208, %s207, 31
      %s210 = smul.addr %s209, 4
      %s211 = scalar_lea.vmem %s2, %s210
      %s212 = smul.u32 16, %s19
      %p213 = scmp.lt.s32.totalorder %s18, 0
      %s214 = scalar_select %p213, %s18, 0
      %s215 = smul.addr %s214, 8
      %s216 = scalar_lea.vmem %s3, %s215
      %p218 = scmp.eq.s32.totalorder %s19, 0
      // Predicated region
      $region33: #{hgn_forward_loss.3} parent=31 // pred_check
        %p219 = pneg %p218
      $region34: #{hgn_forward_loss.3} parent=31 // pred_check_branch
        %221 = sbr.rel (%p219) target = $region36
      $region35: #{hgn_forward_loss.3} parent=31 // pred_region
        %vm222 = vcmask 7168
        %223 = vst.msk [vmem:[#allocation2] sm:$0xff] %vm222, -inf
        %224 = vst.msk [vmem:[#allocation3] sm:$0xff] %vm222, 0.0
      $region36: #{hgn_forward_loss.3} parent=31 // pred_fallthru
        _
      %v225 = vld [vmem:[%s202] sm:$0xff]
      %v226 = vpack.c.bf16 %v225, %v225
      %v227 = vld [vmem:[%s211] sm:$0xf]
      %v228 = vld [vmem:[%s211 + $0x4] sm:$0xf]
      %v229 = vld [vmem:[%s211 + $0x8] sm:$0xf]
      %v230 = vld [vmem:[%s211 + $0xc] sm:$0xf]
      %v231 = vld [vmem:[%s211 + $0x10] sm:$0xf]
      %v232 = vld [vmem:[%s211 + $0x14] sm:$0xf]
      %v233 = vld [vmem:[%s211 + $0x18] sm:$0xf]
      %v234 = vld [vmem:[%s211 + $0x1c] sm:$0xf]
      %v235 = vld [vmem:[%s211 + $0x20] sm:$0xf]
      %v236 = vld [vmem:[%s211 + $0x24] sm:$0xf]
      %v237 = vld [vmem:[%s211 + $0x28] sm:$0xf]
      %v238 = vld [vmem:[%s211 + $0x2c] sm:$0xf]
      %v239 = vld [vmem:[%s211 + $0x30] sm:$0xf]
      %v240 = vld [vmem:[%s211 + $0x34] sm:$0xf]
      %v241 = vld [vmem:[%s211 + $0x38] sm:$0xf]
      %v242 = vld [vmem:[%s211 + $0x3c] sm:$0xf]
      %v259 = vunpack.c.l.b16 %v227
      %v260 = vunpack.c.l.b16 %v228
      %v261 = vunpack.c.l.b16 %v229
      %v262 = vunpack.c.l.b16 %v230
      %v263 = vunpack.c.l.b16 %v231
      %v264 = vunpack.c.l.b16 %v232
      %v265 = vunpack.c.l.b16 %v233
      %v266 = vunpack.c.l.b16 %v234
      %v267 = vunpack.c.l.b16 %v235
      %v268 = vunpack.c.l.b16 %v236
      %v269 = vunpack.c.l.b16 %v237
      %v270 = vunpack.c.l.b16 %v238
      %v271 = vunpack.c.l.b16 %v239
      %v272 = vunpack.c.l.b16 %v240
      %v273 = vunpack.c.l.b16 %v241
      %v274 = vunpack.c.l.b16 %v242
      %v275 = vpack.c.b16 %v260, %v259
      %v276 = vpack.c.b16 %v262, %v261
      %v277 = vpack.c.b16 %v264, %v263
      %v278 = vpack.c.b16 %v266, %v265
      %v279 = vpack.c.b16 %v268, %v267
      %v280 = vpack.c.b16 %v270, %v269
      %v281 = vpack.c.b16 %v272, %v271
      %v282 = vpack.c.b16 %v274, %v273
      %291 = vmatprep.subr.bf16.mxu0 0
      %292 = vmatpush1.bf16.xpose.msra.mxu0 %v275
      %293 = vmatprep.subr.bf16.mxu0 0
      %294 = vmatpush1.bf16.xpose.msra.mxu0 %v276
      %295 = vmatprep.subr.bf16.mxu0 0
      %296 = vmatpush1.bf16.xpose.msra.mxu0 %v277
      %297 = vmatprep.subr.bf16.mxu0 0
      %298 = vmatpush1.bf16.xpose.msra.mxu0 %v278
      %299 = vmatprep.subr.bf16.mxu0 0
      %300 = vmatpush1.bf16.xpose.msra.mxu0 %v279
      %301 = vmatprep.subr.bf16.mxu0 0
      %302 = vmatpush1.bf16.xpose.msra.mxu0 %v280
      %303 = vmatprep.subr.bf16.mxu0 0
      %304 = vmatpush1.bf16.xpose.msra.mxu0 %v281
      %305 = vmatprep.subr.bf16.mxu0 0
      %306 = vmatpush1.bf16.xpose.msra.mxu0 %v282
      %307 = vmatprep.subr.bf16.mxu0 0
      %308 = vmatpush1.bf16.xpose.msra.mxu0 0
      %309 = vmatprep.subr.bf16.mxu0 0
      %310 = vmatpush1.bf16.xpose.msra.mxu0 0
      %311 = vmatprep.subr.bf16.mxu0 0
      %312 = vmatpush1.bf16.xpose.msra.mxu0 0
      %313 = vmatprep.subr.bf16.mxu0 0
      %314 = vmatpush1.bf16.xpose.msra.mxu0 0
      %315 = vmatprep.subr.bf16.mxu0 0
      %316 = vmatpush1.bf16.xpose.msra.mxu0 0
      %317 = vmatprep.subr.bf16.mxu0 0
      %318 = vmatpush1.bf16.xpose.msra.mxu0 0
      %319 = vmatprep.subr.bf16.mxu0 0
      %320 = vmatpush1.bf16.xpose.msra.mxu0 0
      %321 = vmatprep.subr.bf16.mxu0 0
      %322 = vmatpush1.bf16.xpose.msra.mxu0 0
      %323 = vmatprep.mubr.bf16.mxu0 0
      %324 = vmatmul.mubr.bf16.gmra.mrb[0].mxu0 %v226
      %v325 = vpop.f32.mrb[0].mxu0
      %v326 = vadd.f32 0.0, %v325
      %v327 = vpop.f32.mrb[0].mxu0
      %v328 = vpop.f32.mrb[0].mxu0
      %v329 = vpop.f32.mrb[0].mxu0
      %330 = vdwg.mxu0
      %s331 = smul.u32 %s19, 128
      %v332 = vlaneseq
      %v333 = vand.u32 %v332, 127
      %v334 = vstv %s331
      %v335 = vadd.s32 %v334, %v333
      %vm336 = vcmp.ge.s32.totalorder %v335, 1
      %vm337 = vcmp.lt.s32.totalorder %v335, 256
      %vm338 = vmand %vm336, %vm337
      %v339 = vsel %vm338, %v326, -inf
      %v340 = vld [vmem:[#allocation2] sm:$0xff]
      %341 = vmax.xlane.f32.xlu0 %v339
      %v342 = vpop.xlane.xlu0 %341
      %v343 = vmax.f32 %v340, %v342
      %v344 = vsub.f32 %v340, %v343
      %v345 = vmul.f32 %v344, 1.442695
      %v346 = vpow.pop %v345
      %v347 = vld [vmem:[#allocation3] sm:$0xff]
      %v348 = vmul.f32 %v346, %v347
      %350 = vset.pattern.permute.xlu0 0
      %351 = vperm.xlu0 %350, %v343
      %v352 = vpop.permute.xlu0 %351
      %v354 = vsub.f32 %v339, %v352
      %v355 = vmul.f32 %v354, 1.442695
      %v356 = vpow.pop %v355
      %357 = vadd.xlane.f32.xlu0 %v356
      %v358 = vpop.xlane.xlu0 %357
      %v359 = vadd.f32 %v348, %v358
      %vm360 = vcmask 7168
      %361 = vst.msk [vmem:[#allocation3] sm:$0xff] %vm360, %v359
      %362 = vst.msk [vmem:[#allocation2] sm:$0xff] %vm360, %v343
      %p363 = scmp.eq.s32.totalorder %s19, 1
      // Predicated region
      $region37: #{hgn_forward_loss.3} parent=31 // pred_check
        %p364 = pneg %p363
      $region38: #{hgn_forward_loss.3} parent=31 // pred_check_branch
        %366 = sbr.rel (%p364) target = $region40
      $region39: #{hgn_forward_loss.3} parent=31 // pred_region
        %v367 = vld [vmem:[#allocation2] sm:$0xff]
        %v368 = vld [vmem:[#allocation3] sm:$0xff]
        %v369 = vlog2.pop %v368
        %v370 = vmul.f32 %v369, 0.6931472
        %v371 = vadd.f32 %v367, %v370
        %v372 = vld [vmem:[%s206] sm:$0xff]
        %v373 = vmul.f32 %v225, %v372
        %374 = vadd.xlane.f32.xlu0 %v373
        %v375 = vpop.xlane.xlu0 %374
        %v376 = vsub.f32 %v371, %v375
        %377 = vst.msk [vmem:[%s216] sm:$0xff] %vm360, %v376
      $region40: #{hgn_forward_loss.3} parent=31 // pred_fallthru
        _
      %p378 = scmp.lt.s32.totalorder %s18, 0
      %s379 = scalar_select %p378, %s18, 0
      %s380 = smul.addr %s379, 8
      %s381 = scalar_lea.vmem %s3, %s380
      // Predicated region
      $region41: #{hgn_forward_loss.3} parent=31 // pred_check
        %p382 = pneg %p122
      $region42: #{hgn_forward_loss.3} parent=31 // pred_check_branch
        %384 = sbr.rel (%p382) target = $region44
      $region43: #{hgn_forward_loss.3} parent=31 // pred_region
        _
      $region44: #{hgn_forward_loss.3} parent=31 // pred_fallthru
        _
      // Predicated region
      $region45: #{hgn_forward_loss.3} parent=31 // pred_check
        %p385 = pneg %p122
      $region46: #{hgn_forward_loss.3} parent=31 // pred_check_branch
        %387 = sbr.rel (%p385) target = $region48
      $region47: #{hgn_forward_loss.3} parent=31 // pred_region
        %p388 = scmp.lt.s32.totalorder %s18, 0
        %s389 = scalar_select %p388, %s18, 0
        %s390 = smul.addr %s389, 8
        %s391 = scalar_lea.vmem %s3, %s390
      $region48: #{hgn_forward_loss.3} parent=31 // pred_fallthru
        _
    $region32: #{hgn_forward_loss.3} parent=5 // pred_fallthru
      _
    %p392 = scmp.le.s32.totalorder 2, %s9
    // Predicated region
    $region49: #{hgn_forward_loss.3} parent=5 // pred_check
      %p393 = pneg %p392
    $region50: #{hgn_forward_loss.3} parent=5 // pred_check_branch
      %395 = sbr.rel (%p393) target = $region52
    $region51: #{hgn_forward_loss.3} parent=5 // pred_region
      %s396 = ssub.s32 %s9, 2
    $region52: #{hgn_forward_loss.3} parent=5 // pred_fallthru
      _
  $region6: #{hgn_forward_loss.3} parent=0 // loop_footer
    %s13 = sadd.s32 1, %s9
  $region7: #{hgn_forward_loss.3} parent=0 // loop_footer_branch
    %8 = sbr.rel target = $region3
  $region8: #{hgn_forward_loss.3} parent=0 // loop_exit
    _

// kernel: hgn_forward_loss.2
$region0: #{hgn_forward_loss.2}
  #allocation0 [shape = 'u32[]', space=smem, size = 0x4, offset = 0x4, fixed_abs, tag = 'smem constant byte address 0x4 - core index']
  #allocation1 [shape = 'u32[144,128]{1,0:T(1,128)}', space=vmem, size = 0x12000, scoped, tag = 'internal scratch']
  %s0 = inlined_call_operand.vmem [shape: f32[8,8,128], index: 0, kind: input, shape index: {}]
  %s1 = inlined_call_operand.vmem [shape: f32[8,128], index: 1, kind: input, shape index: {}]
  %s2 = inlined_call_operand.vmem [shape: f32[8,8], index: 2, kind: input, shape index: {}]
  %s3 = inlined_call_operand.vmem [shape: f32[128,128], index: 3, kind: input, shape index: {}]
  %s4 = inlined_call_operand.vmem [shape: f32[128,128], index: 4, kind: input, shape index: {}]
  %s5 = inlined_call_operand.vmem [shape: f32[1,128], index: 5, kind: input, shape index: {}]
  %s6 = inlined_call_operand.vmem [shape: f32[1,128], index: 6, kind: input, shape index: {}]
  %s7 = inlined_call_operand.vmem [shape: f32[128,8], index: 7, kind: input, shape index: {}]
  %s8 = inlined_call_operand.vmem [shape: f32[8,128], index: 8, kind: output, shape index: {}]
  %s9 = sld [smem:[#allocation0]]
  $region42: #{hgn_forward_loss.2} parent=0
    _
  %s11 = ssub.s32 1, %s9
  %s12 = scalar_select 0, %s11, %s9
  // Predicated region
  $region2: #{hgn_forward_loss.2} parent=0 // pred_check
    _
  $region3: #{hgn_forward_loss.2} parent=0 // pred_check_branch
    %14 = sbr.rel (0) target = $region5
  $region4: #{hgn_forward_loss.2} parent=0 // pred_region
    _
  $region5: #{hgn_forward_loss.2} parent=0 // pred_fallthru
    _
  // Predicated region
  $region6: #{hgn_forward_loss.2} parent=0 // pred_check
    _
  $region7: #{hgn_forward_loss.2} parent=0 // pred_check_branch
    %16 = sbr.rel (0) target = $region9
  $region8: #{hgn_forward_loss.2} parent=0 // pred_region
    _
  $region9: #{hgn_forward_loss.2} parent=0 // pred_fallthru
    _
  // Predicated region
  $region10: #{hgn_forward_loss.2} parent=0 // pred_check
    _
  $region11: #{hgn_forward_loss.2} parent=0 // pred_check_branch
    %18 = sbr.rel (0) target = $region13
  $region12: #{hgn_forward_loss.2} parent=0 // pred_region
    _
  $region13: #{hgn_forward_loss.2} parent=0 // pred_fallthru
    _
  // Predicated region
  $region14: #{hgn_forward_loss.2} parent=0 // pred_check
    _
  $region15: #{hgn_forward_loss.2} parent=0 // pred_check_branch
    %20 = sbr.rel (0) target = $region17
  $region16: #{hgn_forward_loss.2} parent=0 // pred_region
    _
  $region17: #{hgn_forward_loss.2} parent=0 // pred_fallthru
    _
  // Predicated region
  $region18: #{hgn_forward_loss.2} parent=0 // pred_check
    _
  $region19: #{hgn_forward_loss.2} parent=0 // pred_check_branch
    %22 = sbr.rel (0) target = $region21
  $region20: #{hgn_forward_loss.2} parent=0 // pred_region
    _
  $region21: #{hgn_forward_loss.2} parent=0 // pred_fallthru
    _
  // Predicated region
  $region22: #{hgn_forward_loss.2} parent=0 // pred_check
    _
  $region23: #{hgn_forward_loss.2} parent=0 // pred_check_branch
    %24 = sbr.rel (0) target = $region25
  $region24: #{hgn_forward_loss.2} parent=0 // pred_region
    _
  $region25: #{hgn_forward_loss.2} parent=0 // pred_fallthru
    _
  // Predicated region
  $region26: #{hgn_forward_loss.2} parent=0 // pred_check
    _
  $region27: #{hgn_forward_loss.2} parent=0 // pred_check_branch
    %26 = sbr.rel (0) target = $region29
  $region28: #{hgn_forward_loss.2} parent=0 // pred_region
    _
  $region29: #{hgn_forward_loss.2} parent=0 // pred_fallthru
    _
  // Predicated region
  $region30: #{hgn_forward_loss.2} parent=0 // pred_check
    _
  $region31: #{hgn_forward_loss.2} parent=0 // pred_check_branch
    %28 = sbr.rel (0) target = $region33
  $region32: #{hgn_forward_loss.2} parent=0 // pred_region
    _
  $region33: #{hgn_forward_loss.2} parent=0 // pred_fallthru
    _
  %v29 = vld [vmem:[%s0] sm:$0xff]
  %v30 = vld [vmem:[%s0 + $0x8] sm:$0xff]
  %v31 = vld [vmem:[%s0 + $0x10] sm:$0xff]
  %v32 = vld [vmem:[%s0 + $0x18] sm:$0xff]
  %v33 = vld [vmem:[%s0 + $0x20] sm:$0xff]
  %v34 = vld [vmem:[%s0 + $0x28] sm:$0xff]
  %v35 = vld [vmem:[%s0 + $0x30] sm:$0xff]
  %v36 = vld [vmem:[%s0 + $0x38] sm:$0xff]
  %v37 = vld [vmem:[%s1] sm:$0xff]
  %v38 = vld [vmem:[%s2] sm:$0xff]
  %v39 = vld [vmem:[%s3] sm:$0xff]
  %v40 = vld [vmem:[%s3 + $0x8] sm:$0xff]
  %v41 = vld [vmem:[%s3 + $0x10] sm:$0xff]
  %v42 = vld [vmem:[%s3 + $0x18] sm:$0xff]
  %v43 = vld [vmem:[%s3 + $0x20] sm:$0xff]
  %v44 = vld [vmem:[%s3 + $0x28] sm:$0xff]
  %v45 = vld [vmem:[%s3 + $0x30] sm:$0xff]
  %v46 = vld [vmem:[%s3 + $0x38] sm:$0xff]
  %v47 = vld [vmem:[%s3 + $0x40] sm:$0xff]
  %v48 = vld [vmem:[%s3 + $0x48] sm:$0xff]
  %v49 = vld [vmem:[%s3 + $0x50] sm:$0xff]
  %v50 = vld [vmem:[%s3 + $0x58] sm:$0xff]
  %v51 = vld [vmem:[%s3 + $0x60] sm:$0xff]
  %v52 = vld [vmem:[%s3 + $0x68] sm:$0xff]
  %v53 = vld [vmem:[%s3 + $0x70] sm:$0xff]
  %v54 = vld [vmem:[%s3 + $0x78] sm:$0xff]
  %55 = vmatprep.subr.mxu0 0.0
  %56 = vmatpush1.msra.mxu0 %v39
  %57 = vmatprep.subr.mxu0 0.0
  %58 = vmatpush1.msra.mxu0 %v40
  %59 = vmatprep.subr.mxu0 0.0
  %60 = vmatpush1.msra.mxu0 %v41
  %61 = vmatprep.subr.mxu0 0.0
  %62 = vmatpush1.msra.mxu0 %v42
  %63 = vmatprep.subr.mxu0 0.0
  %64 = vmatpush1.msra.mxu0 %v43
  %65 = vmatprep.subr.mxu0 0.0
  %66 = vmatpush1.msra.mxu0 %v44
  %67 = vmatprep.subr.mxu0 0.0
  %68 = vmatpush1.msra.mxu0 %v45
  %69 = vmatprep.subr.mxu0 0.0
  %70 = vmatpush1.msra.mxu0 %v46
  %71 = vmatprep.subr.mxu0 0.0
  %72 = vmatpush1.msra.mxu0 %v47
  %73 = vmatprep.subr.mxu0 0.0
  %74 = vmatpush1.msra.mxu0 %v48
  %75 = vmatprep.subr.mxu0 0.0
  %76 = vmatpush1.msra.mxu0 %v49
  %77 = vmatprep.subr.mxu0 0.0
  %78 = vmatpush1.msra.mxu0 %v50
  %79 = vmatprep.subr.mxu0 0.0
  %80 = vmatpush1.msra.mxu0 %v51
  %81 = vmatprep.subr.mxu0 0.0
  %82 = vmatpush1.msra.mxu0 %v52
  %83 = vmatprep.subr.mxu0 0.0
  %84 = vmatpush1.msra.mxu0 %v53
  %85 = vmatprep.subr.mxu0 0.0
  %86 = vmatpush1.msra.mxu0 %v54
  %87 = vmatprep.subr.mxu0 0.0
  %88 = vmatpush1.msra.mxu0 0.0
  %89 = vmatprep.subr.mxu0 0.0
  %90 = vmatpush1.msra.mxu0 0.0
  %91 = vmatprep.subr.mxu0 0.0
  %92 = vmatpush1.msra.mxu0 0.0
  %93 = vmatprep.subr.mxu0 0.0
  %94 = vmatpush1.msra.mxu0 0.0
  %95 = vmatprep.subr.mxu0 0.0
  %96 = vmatpush1.msra.mxu0 0.0
  %97 = vmatprep.subr.mxu0 0.0
  %98 = vmatpush1.msra.mxu0 0.0
  %99 = vmatprep.subr.mxu0 0.0
  %100 = vmatpush1.msra.mxu0 0.0
  %101 = vmatprep.subr.mxu0 0.0
  %102 = vmatpush1.msra.mxu0 0.0
  %103 = vmatprep.subr.mxu0 0.0
  %104 = vmatpush1.msra.mxu0 0.0
  %105 = vmatprep.subr.mxu0 0.0
  %106 = vmatpush1.msra.mxu0 0.0
  %107 = vmatprep.subr.mxu0 0.0
  %108 = vmatpush1.msra.mxu0 0.0
  %109 = vmatprep.subr.mxu0 0.0
  %110 = vmatpush1.msra.mxu0 0.0
  %111 = vmatprep.subr.mxu0 0.0
  %112 = vmatpush1.msra.mxu0 0.0
  %113 = vmatprep.subr.mxu0 0.0
  %114 = vmatpush1.msra.mxu0 0.0
  %115 = vmatprep.subr.mxu0 0.0
  %116 = vmatpush1.msra.mxu0 0.0
  %117 = vmatprep.subr.mxu0 0.0
  %118 = vmatpush1.msra.mxu0 0.0
  %119 = vmatprep.mubr.f32.mxu0 0.0
  %120 = vmatmul.mubr.f32.gmra.mrb[0].mxu0 %v29
  %v121 = vpop.f32.mrb[0].mxu0
  %v122 = vadd.f32 0.0, %v121
  %v123 = vpop.f32.mrb[0].mxu0
  %124 = vmatprep.mubr.f32.mxu0 0.0
  %125 = vmatmul.mubr.f32.gmra.mrb[0].mxu0 %v30
  %v126 = vpop.f32.mrb[0].mxu0
  %v127 = vadd.f32 0.0, %v126
  %v128 = vpop.f32.mrb[0].mxu0
  %129 = vmatprep.mubr.f32.mxu0 0.0
  %130 = vmatmul.mubr.f32.gmra.mrb[0].mxu0 %v31
  %v131 = vpop.f32.mrb[0].mxu0
  %v132 = vadd.f32 0.0, %v131
  %v133 = vpop.f32.mrb[0].mxu0
  %134 = vmatprep.mubr.f32.mxu0 0.0
  %135 = vmatmul.mubr.f32.gmra.mrb[0].mxu0 %v32
  %v136 = vpop.f32.mrb[0].mxu0
  %v137 = vadd.f32 0.0, %v136
  %v138 = vpop.f32.mrb[0].mxu0
  %139 = vmatprep.mubr.f32.mxu0 0.0
  %140 = vmatmul.mubr.f32.gmra.mrb[0].mxu0 %v33
  %v141 = vpop.f32.mrb[0].mxu0
  %v142 = vadd.f32 0.0, %v141
  %v143 = vpop.f32.mrb[0].mxu0
  %144 = vmatprep.mubr.f32.mxu0 0.0
  %145 = vmatmul.mubr.f32.gmra.mrb[0].mxu0 %v34
  %v146 = vpop.f32.mrb[0].mxu0
  %v147 = vadd.f32 0.0, %v146
  %v148 = vpop.f32.mrb[0].mxu0
  %149 = vmatprep.mubr.f32.mxu0 0.0
  %150 = vmatmul.mubr.f32.gmra.mrb[0].mxu0 %v35
  %v151 = vpop.f32.mrb[0].mxu0
  %v152 = vadd.f32 0.0, %v151
  %v153 = vpop.f32.mrb[0].mxu0
  %154 = vmatprep.mubr.f32.mxu0 0.0
  %155 = vmatmul.mubr.f32.gmra.mrb[0].mxu0 %v36
  %v156 = vpop.f32.mrb[0].mxu0
  %v157 = vadd.f32 0.0, %v156
  %v158 = vpop.f32.mrb[0].mxu0
  %159 = vdwg.mxu0
  %v160 = vld [vmem:[%s4] sm:$0xff]
  %v161 = vld [vmem:[%s4 + $0x8] sm:$0xff]
  %v162 = vld [vmem:[%s4 + $0x10] sm:$0xff]
  %v163 = vld [vmem:[%s4 + $0x18] sm:$0xff]
  %v164 = vld [vmem:[%s4 + $0x20] sm:$0xff]
  %v165 = vld [vmem:[%s4 + $0x28] sm:$0xff]
  %v166 = vld [vmem:[%s4 + $0x30] sm:$0xff]
  %v167 = vld [vmem:[%s4 + $0x38] sm:$0xff]
  %v168 = vld [vmem:[%s4 + $0x40] sm:$0xff]
  %v169 = vld [vmem:[%s4 + $0x48] sm:$0xff]
  %v170 = vld [vmem:[%s4 + $0x50] sm:$0xff]
  %v171 = vld [vmem:[%s4 + $0x58] sm:$0xff]
  %v172 = vld [vmem:[%s4 + $0x60] sm:$0xff]
  %v173 = vld [vmem:[%s4 + $0x68] sm:$0xff]
  %v174 = vld [vmem:[%s4 + $0x70] sm:$0xff]
  %v175 = vld [vmem:[%s4 + $0x78] sm:$0xff]
  %176 = vmatprep.subr.mxu0 0.0
  %177 = vmatpush1.msra.mxu0 %v160
  %178 = vmatprep.subr.mxu0 0.0
  %179 = vmatpush1.msra.mxu0 %v161
  %180 = vmatprep.subr.mxu0 0.0
  %181 = vmatpush1.msra.mxu0 %v162
  %182 = vmatprep.subr.mxu0 0.0
  %183 = vmatpush1.msra.mxu0 %v163
  %184 = vmatprep.subr.mxu0 0.0
  %185 = vmatpush1.msra.mxu0 %v164
  %186 = vmatprep.subr.mxu0 0.0
  %187 = vmatpush1.msra.mxu0 %v165
  %188 = vmatprep.subr.mxu0 0.0
  %189 = vmatpush1.msra.mxu0 %v166
  %190 = vmatprep.subr.mxu0 0.0
  %191 = vmatpush1.msra.mxu0 %v167
  %192 = vmatprep.subr.mxu0 0.0
  %193 = vmatpush1.msra.mxu0 %v168
  %194 = vmatprep.subr.mxu0 0.0
  %195 = vmatpush1.msra.mxu0 %v169
  %196 = vmatprep.subr.mxu0 0.0
  %197 = vmatpush1.msra.mxu0 %v170
  %198 = vmatprep.subr.mxu0 0.0
  %199 = vmatpush1.msra.mxu0 %v171
  %200 = vmatprep.subr.mxu0 0.0
  %201 = vmatpush1.msra.mxu0 %v172
  %202 = vmatprep.subr.mxu0 0.0
  %203 = vmatpush1.msra.mxu0 %v173
  %204 = vmatprep.subr.mxu0 0.0
  %205 = vmatpush1.msra.mxu0 %v174
  %206 = vmatprep.subr.mxu0 0.0
  %207 = vmatpush1.msra.mxu0 %v175
  %208 = vmatprep.subr.mxu0 0.0
  %209 = vmatpush1.msra.mxu0 0.0
  %210 = vmatprep.subr.mxu0 0.0
  %211 = vmatpush1.msra.mxu0 0.0
  %212 = vmatprep.subr.mxu0 0.0
  %213 = vmatpush1.msra.mxu0 0.0
  %214 = vmatprep.subr.mxu0 0.0
  %215 = vmatpush1.msra.mxu0 0.0
  %216 = vmatprep.subr.mxu0 0.0
  %217 = vmatpush1.msra.mxu0 0.0
  %218 = vmatprep.subr.mxu0 0.0
  %219 = vmatpush1.msra.mxu0 0.0
  %220 = vmatprep.subr.mxu0 0.0
  %221 = vmatpush1.msra.mxu0 0.0
  %222 = vmatprep.subr.mxu0 0.0
  %223 = vmatpush1.msra.mxu0 0.0
  %224 = vmatprep.subr.mxu0 0.0
  %225 = vmatpush1.msra.mxu0 0.0
  %226 = vmatprep.subr.mxu0 0.0
  %227 = vmatpush1.msra.mxu0 0.0
  %228 = vmatprep.subr.mxu0 0.0
  %229 = vmatpush1.msra.mxu0 0.0
  %230 = vmatprep.subr.mxu0 0.0
  %231 = vmatpush1.msra.mxu0 0.0
  %232 = vmatprep.subr.mxu0 0.0
  %233 = vmatpush1.msra.mxu0 0.0
  %234 = vmatprep.subr.mxu0 0.0
  %235 = vmatpush1.msra.mxu0 0.0
  %236 = vmatprep.subr.mxu0 0.0
  %237 = vmatpush1.msra.mxu0 0.0
  %238 = vmatprep.subr.mxu0 0.0
  %239 = vmatpush1.msra.mxu0 0.0
  %240 = vmatprep.mubr.f32.mxu0 0.0
  %241 = vmatmul.mubr.f32.gmra.mrb[0].mxu0 %v37
  %v242 = vpop.f32.mrb[0].mxu0
  %v243 = vadd.f32 0.0, %v242
  %v244 = vpop.f32.mrb[0].mxu0
  %245 = vdwg.mxu0
  %v247 = vcombine.high %v243, %v243
  %v249 = vunpack.c.l.s4 1966171168
  %v250 = vunpack.c.0.s8 %v249
  %v251 = vlaneseq
  %v252 = vshrl.u32 %v251, 7
  %v253 = vsub.s32 %v250, %v252
  %v254 = vrot.slane %v243, %v253
  %v256 = vunpack.c.l.s4 1966171168
  %v257 = vunpack.c.0.s8 %v256
  %v258 = vlaneseq
  %v259 = vshrl.u32 %v258, 7
  %v260 = vsub.s32 %v257, %v259
  %v261 = vrot.slane %v247, %v260
  %v262 = vcombine.high %v254, %v254
  %v263 = vcombine.high %v261, %v261
  %v265 = vunpack.c.l.s4 1966171168
  %v266 = vunpack.c.0.s8 %v265
  %v267 = vlaneseq
  %v268 = vshrl.u32 %v267, 7
  %v269 = vsub.s32 %v266, %v268
  %v270 = vrot.slane %v254, %v269
  %v272 = vunpack.c.l.s4 1966171168
  %v273 = vunpack.c.0.s8 %v272
  %v274 = vlaneseq
  %v275 = vshrl.u32 %v274, 7
  %v276 = vsub.s32 %v273, %v275
  %v277 = vrot.slane %v261, %v276
  %v279 = vunpack.c.l.s4 1966171168
  %v280 = vunpack.c.0.s8 %v279
  %v281 = vlaneseq
  %v282 = vshrl.u32 %v281, 7
  %v283 = vsub.s32 %v280, %v282
  %v284 = vrot.slane %v262, %v283
  %v286 = vunpack.c.l.s4 1966171168
  %v287 = vunpack.c.0.s8 %v286
  %v288 = vlaneseq
  %v289 = vshrl.u32 %v288, 7
  %v290 = vsub.s32 %v287, %v289
  %v291 = vrot.slane %v263, %v290
  %v292 = vcombine.high %v270, %v270
  %v293 = vcombine.high %v277, %v277
  %v294 = vcombine.high %v284, %v284
  %v295 = vcombine.high %v291, %v291
  %v296 = vlaneseq
  %v297 = vshrl.u32 %v296, 7
  %v298 = vsub.s32 0, %v297
  %v299 = vrot.slane %v270, %v298
  %v300 = vlaneseq
  %v301 = vshrl.u32 %v300, 7
  %v302 = vsub.s32 0, %v301
  %v303 = vrot.slane %v284, %v302
  %v304 = vlaneseq
  %v305 = vshrl.u32 %v304, 7
  %v306 = vsub.s32 0, %v305
  %v307 = vrot.slane %v292, %v306
  %v308 = vlaneseq
  %v309 = vshrl.u32 %v308, 7
  %v310 = vsub.s32 0, %v309
  %v311 = vrot.slane %v294, %v310
  %v312 = vlaneseq
  %v313 = vshrl.u32 %v312, 7
  %v314 = vsub.s32 0, %v313
  %v315 = vrot.slane %v277, %v314
  %v316 = vlaneseq
  %v317 = vshrl.u32 %v316, 7
  %v318 = vsub.s32 0, %v317
  %v319 = vrot.slane %v291, %v318
  %v320 = vlaneseq
  %v321 = vshrl.u32 %v320, 7
  %v322 = vsub.s32 0, %v321
  %v323 = vrot.slane %v293, %v322
  %v324 = vlaneseq
  %v325 = vshrl.u32 %v324, 7
  %v326 = vsub.s32 0, %v325
  %v327 = vrot.slane %v295, %v326
  %v336 = vadd.f32 %v122, %v299
  %v337 = vadd.f32 %v127, %v303
  %v338 = vadd.f32 %v132, %v307
  %v339 = vadd.f32 %v137, %v311
  %v340 = vadd.f32 %v142, %v315
  %v341 = vadd.f32 %v147, %v319
  %v342 = vadd.f32 %v152, %v323
  %v343 = vadd.f32 %v157, %v327
  %v344 = vld [vmem:[%s5] sm:$0x1]
  %v346 = vlaneseq
  %v347 = vshrl.u32 %v346, 7
  %v348 = vsub.s32 0, %v347
  %v349 = vrot.slane %v344, %v348
  %v351 = vadd.f32 %v336, %v349
  %v352 = vadd.f32 %v337, %v349
  %v353 = vadd.f32 %v338, %v349
  %v354 = vadd.f32 %v339, %v349
  %v355 = vadd.f32 %v340, %v349
  %v356 = vadd.f32 %v341, %v349
  %v357 = vadd.f32 %v342, %v349
  %v358 = vadd.f32 %v343, %v349
  %v359 = vxor.u32 %v351, 2147483648
  %v360 = vxor.u32 %v352, 2147483648
  %v361 = vxor.u32 %v353, 2147483648
  %v362 = vxor.u32 %v354, 2147483648
  %v363 = vxor.u32 %v355, 2147483648
  %v364 = vxor.u32 %v356, 2147483648
  %v365 = vxor.u32 %v357, 2147483648
  %v366 = vxor.u32 %v358, 2147483648
  %v367 = vmul.f32 %v359, 1.442695
  %v368 = vpow.pop %v367
  %v369 = vmul.f32 %v360, 1.442695
  %v370 = vpow.pop %v369
  %v371 = vmul.f32 %v361, 1.442695
  %v372 = vpow.pop %v371
  %v373 = vmul.f32 %v362, 1.442695
  %v374 = vpow.pop %v373
  %v375 = vmul.f32 %v363, 1.442695
  %v376 = vpow.pop %v375
  %v377 = vmul.f32 %v364, 1.442695
  %v378 = vpow.pop %v377
  %v379 = vmul.f32 %v365, 1.442695
  %v380 = vpow.pop %v379
  %v381 = vmul.f32 %v366, 1.442695
  %v382 = vpow.pop %v381
  %v383 = vadd.f32 %v368, 1.0
  %v384 = vadd.f32 %v370, 1.0
  %v385 = vadd.f32 %v372, 1.0
  %v386 = vadd.f32 %v374, 1.0
  %v387 = vadd.f32 %v376, 1.0
  %v388 = vadd.f32 %v378, 1.0
  %v389 = vadd.f32 %v380, 1.0
  %v390 = vadd.f32 %v382, 1.0
  %v391 = vrcp.pop %v383
  %v392 = vmul.f32 1.0, %v391
  %v393 = vrcp.pop %v384
  %v394 = vmul.f32 1.0, %v393
  %v395 = vrcp.pop %v385
  %v396 = vmul.f32 1.0, %v395
  %v397 = vrcp.pop %v386
  %v398 = vmul.f32 1.0, %v397
  %v399 = vrcp.pop %v387
  %v400 = vmul.f32 1.0, %v399
  %v401 = vrcp.pop %v388
  %v402 = vmul.f32 1.0, %v401
  %v403 = vrcp.pop %v389
  %v404 = vmul.f32 1.0, %v403
  %v405 = vrcp.pop %v390
  %v406 = vmul.f32 1.0, %v405
  %v407 = vmul.f32 %v29, %v392
  %v408 = vmul.f32 %v30, %v394
  %v409 = vmul.f32 %v31, %v396
  %v410 = vmul.f32 %v32, %v398
  %v411 = vmul.f32 %v33, %v400
  %v412 = vmul.f32 %v34, %v402
  %v413 = vmul.f32 %v35, %v404
  %v414 = vmul.f32 %v36, %v406
  %v415 = vld [vmem:[%s6] sm:$0x1]
  %v417 = vlaneseq
  %v418 = vshrl.u32 %v417, 7
  %v419 = vsub.s32 0, %v418
  %v420 = vrot.slane %v415, %v419
  %v422 = vmul.f32 %v407, %v420
  %v423 = vmul.f32 %v408, %v420
  %v424 = vmul.f32 %v409, %v420
  %v425 = vmul.f32 %v410, %v420
  %v426 = vmul.f32 %v411, %v420
  %v427 = vmul.f32 %v412, %v420
  %v428 = vmul.f32 %v413, %v420
  %v429 = vmul.f32 %v414, %v420
  %430 = vadd.xlane.f32.xlu0 %v422
  %v431 = vpop.xlane.xlu0 %430
  %432 = vadd.xlane.f32.xlu0 %v423
  %v433 = vpop.xlane.xlu0 %432
  %434 = vadd.xlane.f32.xlu0 %v424
  %v435 = vpop.xlane.xlu0 %434
  %436 = vadd.xlane.f32.xlu0 %v425
  %v437 = vpop.xlane.xlu0 %436
  %438 = vadd.xlane.f32.xlu0 %v426
  %v439 = vpop.xlane.xlu0 %438
  %440 = vadd.xlane.f32.xlu0 %v427
  %v441 = vpop.xlane.xlu0 %440
  %442 = vadd.xlane.f32.xlu0 %v428
  %v443 = vpop.xlane.xlu0 %442
  %444 = vadd.xlane.f32.xlu0 %v429
  %v445 = vpop.xlane.xlu0 %444
  %v446 = vld [vmem:[%s7] sm:$0xff]
  %v447 = vld [vmem:[%s7 + $0x8] sm:$0xff]
  %v448 = vld [vmem:[%s7 + $0x10] sm:$0xff]
  %v449 = vld [vmem:[%s7 + $0x18] sm:$0xff]
  %v450 = vld [vmem:[%s7 + $0x20] sm:$0xff]
  %v451 = vld [vmem:[%s7 + $0x28] sm:$0xff]
  %v452 = vld [vmem:[%s7 + $0x30] sm:$0xff]
  %v453 = vld [vmem:[%s7 + $0x38] sm:$0xff]
  %v454 = vld [vmem:[%s7 + $0x40] sm:$0xff]
  %v455 = vld [vmem:[%s7 + $0x48] sm:$0xff]
  %v456 = vld [vmem:[%s7 + $0x50] sm:$0xff]
  %v457 = vld [vmem:[%s7 + $0x58] sm:$0xff]
  %v458 = vld [vmem:[%s7 + $0x60] sm:$0xff]
  %v459 = vld [vmem:[%s7 + $0x68] sm:$0xff]
  %v460 = vld [vmem:[%s7 + $0x70] sm:$0xff]
  %v461 = vld [vmem:[%s7 + $0x78] sm:$0xff]
  %462 = vmatprep.subr.mxu0 0.0
  %463 = vmatpush1.msra.mxu0 %v446
  %464 = vmatprep.subr.mxu0 0.0
  %465 = vmatpush1.msra.mxu0 %v447
  %466 = vmatprep.subr.mxu0 0.0
  %467 = vmatpush1.msra.mxu0 %v448
  %468 = vmatprep.subr.mxu0 0.0
  %469 = vmatpush1.msra.mxu0 %v449
  %470 = vmatprep.subr.mxu0 0.0
  %471 = vmatpush1.msra.mxu0 %v450
  %472 = vmatprep.subr.mxu0 0.0
  %473 = vmatpush1.msra.mxu0 %v451
  %474 = vmatprep.subr.mxu0 0.0
  %475 = vmatpush1.msra.mxu0 %v452
  %476 = vmatprep.subr.mxu0 0.0
  %477 = vmatpush1.msra.mxu0 %v453
  %478 = vmatprep.subr.mxu0 0.0
  %479 = vmatpush1.msra.mxu0 %v454
  %480 = vmatprep.subr.mxu0 0.0
  %481 = vmatpush1.msra.mxu0 %v455
  %482 = vmatprep.subr.mxu0 0.0
  %483 = vmatpush1.msra.mxu0 %v456
  %484 = vmatprep.subr.mxu0 0.0
  %485 = vmatpush1.msra.mxu0 %v457
  %486 = vmatprep.subr.mxu0 0.0
  %487 = vmatpush1.msra.mxu0 %v458
  %488 = vmatprep.subr.mxu0 0.0
  %489 = vmatpush1.msra.mxu0 %v459
  %490 = vmatprep.subr.mxu0 0.0
  %491 = vmatpush1.msra.mxu0 %v460
  %492 = vmatprep.subr.mxu0 0.0
  %493 = vmatpush1.msra.mxu0 %v461
  %494 = vmatprep.subr.mxu0 0.0
  %495 = vmatpush1.msra.mxu0 0.0
  %496 = vmatprep.subr.mxu0 0.0
  %497 = vmatpush1.msra.mxu0 0.0
  %498 = vmatprep.subr.mxu0 0.0
  %499 = vmatpush1.msra.mxu0 0.0
  %500 = vmatprep.subr.mxu0 0.0
  %501 = vmatpush1.msra.mxu0 0.0
  %502 = vmatprep.subr.mxu0 0.0
  %503 = vmatpush1.msra.mxu0 0.0
  %504 = vmatprep.subr.mxu0 0.0
  %505 = vmatpush1.msra.mxu0 0.0
  %506 = vmatprep.subr.mxu0 0.0
  %507 = vmatpush1.msra.mxu0 0.0
  %508 = vmatprep.subr.mxu0 0.0
  %509 = vmatpush1.msra.mxu0 0.0
  %510 = vmatprep.subr.mxu0 0.0
  %511 = vmatpush1.msra.mxu0 0.0
  %512 = vmatprep.subr.mxu0 0.0
  %513 = vmatpush1.msra.mxu0 0.0
  %514 = vmatprep.subr.mxu0 0.0
  %515 = vmatpush1.msra.mxu0 0.0
  %516 = vmatprep.subr.mxu0 0.0
  %517 = vmatpush1.msra.mxu0 0.0
  %518 = vmatprep.subr.mxu0 0.0
  %519 = vmatpush1.msra.mxu0 0.0
  %520 = vmatprep.subr.mxu0 0.0
  %521 = vmatpush1.msra.mxu0 0.0
  %522 = vmatprep.subr.mxu0 0.0
  %523 = vmatpush1.msra.mxu0 0.0
  %524 = vmatprep.subr.mxu0 0.0
  %525 = vmatpush1.msra.mxu0 0.0
  %526 = vmatprep.mubr.f32.mxu0 0.0
  %527 = vmatmul.mubr.f32.gmra.mrb[0].mxu0 %v37
  %v528 = vpop.f32.mrb[0].mxu0
  %v529 = vadd.f32 0.0, %v528
  %v530 = vpop.f32.mrb[0].mxu0
  %531 = vdwg.mxu0
  %v533 = vlaneseq
  %v534 = vshrl.u32 %v533, 7
  %v535 = vsub.s32 0, %v534
  %v536 = vrot.slane %v529, %v535
  %538 = vbcast.lane.b32.xlu0 %v536, 256
  %v539 = vpop.permute.xlu0 %538
  %v540 = vlaneseq
  %v541 = vshrl.u32 %v540, 7
  %v542 = vsub.s32 1, %v541
  %v543 = vrot.slane %v529, %v542
  %545 = vbcast.lane.b32.xlu0 %v543, 256
  %v546 = vpop.permute.xlu0 %545
  %v547 = vlaneseq
  %v548 = vshrl.u32 %v547, 7
  %v549 = vsub.s32 2, %v548
  %v550 = vrot.slane %v529, %v549
  %552 = vbcast.lane.b32.xlu0 %v550, 256
  %v553 = vpop.permute.xlu0 %552
  %v554 = vlaneseq
  %v555 = vshrl.u32 %v554, 7
  %v556 = vsub.s32 3, %v555
  %v557 = vrot.slane %v529, %v556
  %559 = vbcast.lane.b32.xlu0 %v557, 256
  %v560 = vpop.permute.xlu0 %559
  %v561 = vlaneseq
  %v562 = vshrl.u32 %v561, 7
  %v563 = vsub.s32 4, %v562
  %v564 = vrot.slane %v529, %v563
  %566 = vbcast.lane.b32.xlu0 %v564, 256
  %v567 = vpop.permute.xlu0 %566
  %v568 = vlaneseq
  %v569 = vshrl.u32 %v568, 7
  %v570 = vsub.s32 5, %v569
  %v571 = vrot.slane %v529, %v570
  %573 = vbcast.lane.b32.xlu0 %v571, 256
  %v574 = vpop.permute.xlu0 %573
  %v575 = vlaneseq
  %v576 = vshrl.u32 %v575, 7
  %v577 = vsub.s32 6, %v576
  %v578 = vrot.slane %v529, %v577
  %580 = vbcast.lane.b32.xlu0 %v578, 256
  %v581 = vpop.permute.xlu0 %580
  %v582 = vlaneseq
  %v583 = vshrl.u32 %v582, 7
  %v584 = vsub.s32 7, %v583
  %v585 = vrot.slane %v529, %v584
  %587 = vbcast.lane.b32.xlu0 %v585, 256
  %v588 = vpop.permute.xlu0 %587
  %v597 = vadd.f32 %v431, %v539
  %v598 = vadd.f32 %v433, %v546
  %v599 = vadd.f32 %v435, %v553
  %v600 = vadd.f32 %v437, %v560
  %v601 = vadd.f32 %v439, %v567
  %v602 = vadd.f32 %v441, %v574
  %v603 = vadd.f32 %v443, %v581
  %v604 = vadd.f32 %v445, %v588
  %v605 = vxor.u32 %v597, 2147483648
  %v606 = vxor.u32 %v598, 2147483648
  %v607 = vxor.u32 %v599, 2147483648
  %v608 = vxor.u32 %v600, 2147483648
  %v609 = vxor.u32 %v601, 2147483648
  %v610 = vxor.u32 %v602, 2147483648
  %v611 = vxor.u32 %v603, 2147483648
  %v612 = vxor.u32 %v604, 2147483648
  %v613 = vmul.f32 %v605, 1.442695
  %v614 = vpow.pop %v613
  %v615 = vmul.f32 %v606, 1.442695
  %v616 = vpow.pop %v615
  %v617 = vmul.f32 %v607, 1.442695
  %v618 = vpow.pop %v617
  %v619 = vmul.f32 %v608, 1.442695
  %v620 = vpow.pop %v619
  %v621 = vmul.f32 %v609, 1.442695
  %v622 = vpow.pop %v621
  %v623 = vmul.f32 %v610, 1.442695
  %v624 = vpow.pop %v623
  %v625 = vmul.f32 %v611, 1.442695
  %v626 = vpow.pop %v625
  %v627 = vmul.f32 %v612, 1.442695
  %v628 = vpow.pop %v627
  %v629 = vadd.f32 %v614, 1.0
  %v630 = vadd.f32 %v616, 1.0
  %v631 = vadd.f32 %v618, 1.0
  %v632 = vadd.f32 %v620, 1.0
  %v633 = vadd.f32 %v622, 1.0
  %v634 = vadd.f32 %v624, 1.0
  %v635 = vadd.f32 %v626, 1.0
  %v636 = vadd.f32 %v628, 1.0
  %v637 = vrcp.pop %v629
  %v638 = vmul.f32 1.0, %v637
  %v639 = vrcp.pop %v630
  %v640 = vmul.f32 1.0, %v639
  %v641 = vrcp.pop %v631
  %v642 = vmul.f32 1.0, %v641
  %v643 = vrcp.pop %v632
  %v644 = vmul.f32 1.0, %v643
  %v645 = vrcp.pop %v633
  %v646 = vmul.f32 1.0, %v645
  %v647 = vrcp.pop %v634
  %v648 = vmul.f32 1.0, %v647
  %v649 = vrcp.pop %v635
  %v650 = vmul.f32 1.0, %v649
  %v651 = vrcp.pop %v636
  %v652 = vmul.f32 1.0, %v651
  %654 = vset.pattern.permute.xlu0 0
  %655 = vperm.xlu0 %654, %v638
  %v656 = vpop.permute.xlu0 %655
  %659 = vset.pattern.permute.xlu0 0
  %660 = vperm.xlu0 %659, %v640
  %v661 = vpop.permute.xlu0 %660
  %664 = vset.pattern.permute.xlu0 0
  %665 = vperm.xlu0 %664, %v642
  %v666 = vpop.permute.xlu0 %665
  %669 = vset.pattern.permute.xlu0 0
  %670 = vperm.xlu0 %669, %v644
  %v671 = vpop.permute.xlu0 %670
  %674 = vset.pattern.permute.xlu0 0
  %675 = vperm.xlu0 %674, %v646
  %v676 = vpop.permute.xlu0 %675
  %679 = vset.pattern.permute.xlu0 0
  %680 = vperm.xlu0 %679, %v648
  %v681 = vpop.permute.xlu0 %680
  %684 = vset.pattern.permute.xlu0 0
  %685 = vperm.xlu0 %684, %v650
  %v686 = vpop.permute.xlu0 %685
  %689 = vset.pattern.permute.xlu0 0
  %690 = vperm.xlu0 %689, %v652
  %v691 = vpop.permute.xlu0 %690
  %v693 = vmul.f32 %v407, %v656
  %v694 = vmul.f32 %v408, %v661
  %v695 = vmul.f32 %v409, %v666
  %v696 = vmul.f32 %v410, %v671
  %v697 = vmul.f32 %v411, %v676
  %v698 = vmul.f32 %v412, %v681
  %v699 = vmul.f32 %v413, %v686
  %v700 = vmul.f32 %v414, %v691
  %v701 = vlaneseq
  %v702 = vshrl.u32 %v701, 7
  %v703 = vsub.s32 0, %v702
  %v704 = vrot.slane %v38, %v703
  %706 = vbcast.lane.b32.xlu0 %v704, 256
  %v707 = vpop.permute.xlu0 %706
  %v708 = vlaneseq
  %v709 = vshrl.u32 %v708, 7
  %v710 = vsub.s32 1, %v709
  %v711 = vrot.slane %v38, %v710
  %713 = vbcast.lane.b32.xlu0 %v711, 256
  %v714 = vpop.permute.xlu0 %713
  %v715 = vlaneseq
  %v716 = vshrl.u32 %v715, 7
  %v717 = vsub.s32 2, %v716
  %v718 = vrot.slane %v38, %v717
  %720 = vbcast.lane.b32.xlu0 %v718, 256
  %v721 = vpop.permute.xlu0 %720
  %v722 = vlaneseq
  %v723 = vshrl.u32 %v722, 7
  %v724 = vsub.s32 3, %v723
  %v725 = vrot.slane %v38, %v724
  %727 = vbcast.lane.b32.xlu0 %v725, 256
  %v728 = vpop.permute.xlu0 %727
  %v729 = vlaneseq
  %v730 = vshrl.u32 %v729, 7
  %v731 = vsub.s32 4, %v730
  %v732 = vrot.slane %v38, %v731
  %734 = vbcast.lane.b32.xlu0 %v732, 256
  %v735 = vpop.permute.xlu0 %734
  %v736 = vlaneseq
  %v737 = vshrl.u32 %v736, 7
  %v738 = vsub.s32 5, %v737
  %v739 = vrot.slane %v38, %v738
  %741 = vbcast.lane.b32.xlu0 %v739, 256
  %v742 = vpop.permute.xlu0 %741
  %v743 = vlaneseq
  %v744 = vshrl.u32 %v743, 7
  %v745 = vsub.s32 6, %v744
  %v746 = vrot.slane %v38, %v745
  %748 = vbcast.lane.b32.xlu0 %v746, 256
  %v749 = vpop.permute.xlu0 %748
  %v750 = vlaneseq
  %v751 = vshrl.u32 %v750, 7
  %v752 = vsub.s32 7, %v751
  %v753 = vrot.slane %v38, %v752
  %755 = vbcast.lane.b32.xlu0 %v753, 256
  %v756 = vpop.permute.xlu0 %755
  %vm757 = vcmask 64512
  %v758 = vsel %vm757, %v38, 0.0
  %759 = vadd.xlane.f32.xlu0 %v758
  %v760 = vpop.xlane.xlu0 %759
  %v761 = vmax.f32 %v760, 1.0
  %v762 = vmul.f32 %v693, %v707
  %v763 = vmul.f32 %v694, %v714
  %v764 = vmul.f32 %v695, %v721
  %v765 = vmul.f32 %v696, %v728
  %v766 = vmul.f32 %v697, %v735
  %v767 = vmul.f32 %v698, %v742
  %v768 = vmul.f32 %v699, %v749
  %v769 = vmul.f32 %v700, %v756
  %v770 = vrot.slane %v762, 4
  %v771 = vadd.f32 %v762, %v770
  %v772 = vrot.slane %v771, 2
  %v773 = vadd.f32 %v771, %v772
  %v774 = vrot.slane %v773, 1
  %v775 = vadd.f32 %v773, %v774
  %v776 = vrot.slane %v763, 4
  %v777 = vadd.f32 %v763, %v776
  %v778 = vrot.slane %v777, 2
  %v779 = vadd.f32 %v777, %v778
  %v780 = vrot.slane %v779, 1
  %v781 = vadd.f32 %v779, %v780
  %v782 = vrot.slane %v764, 4
  %v783 = vadd.f32 %v764, %v782
  %v784 = vrot.slane %v783, 2
  %v785 = vadd.f32 %v783, %v784
  %v786 = vrot.slane %v785, 1
  %v787 = vadd.f32 %v785, %v786
  %v788 = vrot.slane %v765, 4
  %v789 = vadd.f32 %v765, %v788
  %v790 = vrot.slane %v789, 2
  %v791 = vadd.f32 %v789, %v790
  %v792 = vrot.slane %v791, 1
  %v793 = vadd.f32 %v791, %v792
  %v794 = vrot.slane %v766, 4
  %v795 = vadd.f32 %v766, %v794
  %v796 = vrot.slane %v795, 2
  %v797 = vadd.f32 %v795, %v796
  %v798 = vrot.slane %v797, 1
  %v799 = vadd.f32 %v797, %v798
  %v800 = vrot.slane %v767, 4
  %v801 = vadd.f32 %v767, %v800
  %v802 = vrot.slane %v801, 2
  %v803 = vadd.f32 %v801, %v802
  %v804 = vrot.slane %v803, 1
  %v805 = vadd.f32 %v803, %v804
  %v806 = vrot.slane %v768, 4
  %v807 = vadd.f32 %v768, %v806
  %v808 = vrot.slane %v807, 2
  %v809 = vadd.f32 %v807, %v808
  %v810 = vrot.slane %v809, 1
  %v811 = vadd.f32 %v809, %v810
  %v812 = vrot.slane %v769, 4
  %v813 = vadd.f32 %v769, %v812
  %v814 = vrot.slane %v813, 2
  %v815 = vadd.f32 %v813, %v814
  %v816 = vrot.slane %v815, 1
  %v817 = vadd.f32 %v815, %v816
  %v819 = vrot.slane %v761, 1
  %v820 = vrot.slane %v761, 2
  %v821 = vrot.slane %v761, 3
  %v822 = vrot.slane %v761, 4
  %v823 = vrot.slane %v761, 5
  %v824 = vrot.slane %v761, 6
  %v825 = vrot.slane %v761, 7
  %v834 = vrcp.pop %v761
  %v835 = vmul.f32 %v775, %v834
  %v836 = vrcp.pop %v819
  %v837 = vmul.f32 %v781, %v836
  %v838 = vrcp.pop %v820
  %v839 = vmul.f32 %v787, %v838
  %v840 = vrcp.pop %v821
  %v841 = vmul.f32 %v793, %v840
  %v842 = vrcp.pop %v822
  %v843 = vmul.f32 %v799, %v842
  %v844 = vrcp.pop %v823
  %v845 = vmul.f32 %v805, %v844
  %v846 = vrcp.pop %v824
  %v847 = vmul.f32 %v811, %v846
  %v848 = vrcp.pop %v825
  %v849 = vmul.f32 %v817, %v848
  %v850 = vmul.f32 %v29, %v707
  %v851 = vmul.f32 %v30, %v714
  %v852 = vmul.f32 %v31, %v721
  %v853 = vmul.f32 %v32, %v728
  %v854 = vmul.f32 %v33, %v735
  %v855 = vmul.f32 %v34, %v742
  %v856 = vmul.f32 %v35, %v749
  %v857 = vmul.f32 %v36, %v756
  %v858 = vrot.slane %v850, 4
  %v859 = vadd.f32 %v850, %v858
  %v860 = vrot.slane %v859, 2
  %v861 = vadd.f32 %v859, %v860
  %v862 = vrot.slane %v861, 1
  %v863 = vadd.f32 %v861, %v862
  %v864 = vrot.slane %v851, 4
  %v865 = vadd.f32 %v851, %v864
  %v866 = vrot.slane %v865, 2
  %v867 = vadd.f32 %v865, %v866
  %v868 = vrot.slane %v867, 1
  %v869 = vadd.f32 %v867, %v868
  %v870 = vrot.slane %v852, 4
  %v871 = vadd.f32 %v852, %v870
  %v872 = vrot.slane %v871, 2
  %v873 = vadd.f32 %v871, %v872
  %v874 = vrot.slane %v873, 1
  %v875 = vadd.f32 %v873, %v874
  %v876 = vrot.slane %v853, 4
  %v877 = vadd.f32 %v853, %v876
  %v878 = vrot.slane %v877, 2
  %v879 = vadd.f32 %v877, %v878
  %v880 = vrot.slane %v879, 1
  %v881 = vadd.f32 %v879, %v880
  %v882 = vrot.slane %v854, 4
  %v883 = vadd.f32 %v854, %v882
  %v884 = vrot.slane %v883, 2
  %v885 = vadd.f32 %v883, %v884
  %v886 = vrot.slane %v885, 1
  %v887 = vadd.f32 %v885, %v886
  %v888 = vrot.slane %v855, 4
  %v889 = vadd.f32 %v855, %v888
  %v890 = vrot.slane %v889, 2
  %v891 = vadd.f32 %v889, %v890
  %v892 = vrot.slane %v891, 1
  %v893 = vadd.f32 %v891, %v892
  %v894 = vrot.slane %v856, 4
  %v895 = vadd.f32 %v856, %v894
  %v896 = vrot.slane %v895, 2
  %v897 = vadd.f32 %v895, %v896
  %v898 = vrot.slane %v897, 1
  %v899 = vadd.f32 %v897, %v898
  %v900 = vrot.slane %v857, 4
  %v901 = vadd.f32 %v857, %v900
  %v902 = vrot.slane %v901, 2
  %v903 = vadd.f32 %v901, %v902
  %v904 = vrot.slane %v903, 1
  %v905 = vadd.f32 %v903, %v904
  %v914 = vrot.slane %v837, 7
  %vm915 = vcmask 1041409
  %v916 = vsel %vm915, %v914, %v835
  %v917 = vrot.slane %v839, 6
  %vm918 = vcmask 1042434
  %v919 = vsel %vm918, %v917, %v916
  %v920 = vrot.slane %v841, 5
  %vm921 = vcmask 1043459
  %v922 = vsel %vm921, %v920, %v919
  %v923 = vrot.slane %v843, 4
  %vm924 = vcmask 1044484
  %v925 = vsel %vm924, %v923, %v922
  %v926 = vrot.slane %v845, 3
  %vm927 = vcmask 1045509
  %v928 = vsel %vm927, %v926, %v925
  %v929 = vrot.slane %v847, 2
  %vm930 = vcmask 1046534
  %v931 = vsel %vm930, %v929, %v928
  %v932 = vrot.slane %v849, 1
  %vm933 = vcmask 1047559
  %v934 = vsel %vm933, %v932, %v931
  %v936 = vadd.f32 %v37, %v934
  %v945 = vsel %vm915, %v869, %v863
  %v946 = vsel %vm918, %v875, %v945
  %v947 = vsel %vm921, %v881, %v946
  %v948 = vsel %vm924, %v887, %v947
  %v949 = vsel %vm927, %v893, %v948
  %v950 = vsel %vm930, %v899, %v949
  %v951 = vsel %vm933, %v905, %v950
  %v953 = vadd.f32 %v936, %v951
  %954 = vst [vmem:[%s8] sm:$0xff] %v953
  // Predicated region
  $region34: #{hgn_forward_loss.2} parent=0 // pred_check
    _
  $region35: #{hgn_forward_loss.2} parent=0 // pred_check_branch
    %956 = sbr.rel (0) target = $region37
  $region36: #{hgn_forward_loss.2} parent=0 // pred_region
    _
  $region37: #{hgn_forward_loss.2} parent=0 // pred_fallthru
    _
  // Predicated region
  $region38: #{hgn_forward_loss.2} parent=0 // pred_check
    _
  $region39: #{hgn_forward_loss.2} parent=0 // pred_check_branch
    %958 = sbr.rel (0) target = $region41
  $region40: #{hgn_forward_loss.2} parent=0 // pred_region
    _
  $region41: #{hgn_forward_loss.2} parent=0 // pred_fallthru
    _

</llo_original>
